<compile_context>
chip_gen: v7x
topology: tpu7x:2x2x1
jax: 0.10.0
libtpu: 0.0.40
codegen_flags: <defaults>
</compile_context>

<pallas_src>
import functools

import jax
import jax.numpy as jnp
import numpy as np
from jax.experimental import pallas as pl
from jax.experimental.pallas import tpu as pltpu

EPS = 1e-5


# ---------------------------------------------------------------------------
# Host-side constant masks (computed with numpy at trace time)
# ---------------------------------------------------------------------------
def _conv_tap_masks(H, W):
    """(9, 1, H*W) f32 validity masks for the 3x3 taps (zero padding)."""
    ys, xs = np.meshgrid(np.arange(H), np.arange(W), indexing="ij")
    masks = []
    for dy in (-1, 0, 1):
        for dx in (-1, 0, 1):
            m = ((ys + dy >= 0) & (ys + dy < H) &
                 (xs + dx >= 0) & (xs + dx < W)).astype(np.float32).reshape(-1)
            masks.append(m)
    return np.stack(masks, axis=0).reshape(9, 1, H * W)


# ---------------------------------------------------------------------------
# Fused Pallas kernel (one grid step == one sample)
# ---------------------------------------------------------------------------
def _gsc2d_kernel(x_ref, tapm_ref, w1_ref, w2_ref, w3_ref, w4_ref, b_ref,
                  o_ref, *, H, W, eps):
    HW = H * W
    inv_hw = 1.0 / float(HW)

    x = x_ref[0]                                     # (C, HW) f32

    def conv3x3(h, w9_ref, b_col):
        # 3x3 conv (stride 1, pad 1) as 9 shifted views of the (C, HW) tile.
        # Shift on the flattened lane axis + edge mask == zero-padded conv.
        acc = jnp.dot(w9_ref[4], h, preferred_element_type=jnp.float32)  # center
        t = 0
        for dy in (-1, 0, 1):
            for dx in (-1, 0, 1):
                s = dy * W + dx                      # flat shift within sample
                if s != 0:
                    ht = pltpu.roll(h, (-s) % HW, axis=1) * tapm_ref[t]
                    acc = acc + jnp.dot(w9_ref[t], ht,
                                        preferred_element_type=jnp.float32)
                t += 1
        return acc + b_col

    def conv1x1(h, w_ref, b_col):
        return jnp.dot(w_ref[...], h, preferred_element_type=jnp.float32) + b_col

    def inorm_relu(h):
        # InstanceNorm2d(affine=False, eps) + ReLU; E[h^2] - mean^2 form.
        s1 = jnp.sum(h, axis=-1, keepdims=True)            # (C, 1)
        s2 = jnp.sum(h * h, axis=-1, keepdims=True)        # (C, 1)
        mean = s1 * inv_hw
        var = s2 * inv_hw - mean * mean
        scale = jax.lax.rsqrt(var + eps)
        return jnp.maximum((h - mean) * scale, 0.0)

    h1 = inorm_relu(conv3x3(x, w1_ref, b_ref[0]))          # proj  -> norm  -> relu
    h2 = inorm_relu(conv3x3(h1, w2_ref, b_ref[1]))         # proj2 -> norm2 -> relu
    h3 = inorm_relu(conv1x1(x, w3_ref, b_ref[2]))          # proj3 -> norm3 -> relu
    h4 = inorm_relu(conv1x1(h2 + h3, w4_ref, b_ref[3]))    # proj4 -> norm4 -> relu
    o_ref[0] = h4 + x                                      # residual


# ---------------------------------------------------------------------------
# Wrapper
# ---------------------------------------------------------------------------
@jax.jit
def gsc2d_forward(x, params):
    N, C, H, W = x.shape
    HW = H * W
    x = x.astype(jnp.float32)
    x3d = x.reshape(N, C, HW)                               # free reshape

    # (O, I, 3, 3) -> (9, O, I), tap index t = ky*3 + kx (matches kernel order).
    w1_9 = jnp.transpose(params["w1"].astype(jnp.float32), (2, 3, 0, 1)).reshape(9, C, C)
    w2_9 = jnp.transpose(params["w2"].astype(jnp.float32), (2, 3, 0, 1)).reshape(9, C, C)
    w3m = params["w3"].astype(jnp.float32).reshape(C, C)
    w4m = params["w4"].astype(jnp.float32).reshape(C, C)
    biases = jnp.stack([params["b1"], params["b2"], params["b3"], params["b4"]],
                       axis=0).astype(jnp.float32).reshape(4, C, 1)

    tap_masks = jnp.asarray(_conv_tap_masks(H, W))          # (9, 1, HW)

    kernel = functools.partial(_gsc2d_kernel, H=H, W=W, eps=EPS)
    out3d = pl.pallas_call(
        kernel,
        out_shape=jax.ShapeDtypeStruct((N, C, HW), jnp.float32),
        grid_spec=pltpu.PrefetchScalarGridSpec(
            num_scalar_prefetch=0,
            grid=(N,),
            in_specs=[
                pl.BlockSpec((1, C, HW), lambda n: (n, 0, 0)),   # x, per sample
                pl.BlockSpec((9, 1, HW), lambda n: (0, 0, 0)),   # tap masks (resident)
                pl.BlockSpec((9, C, C), lambda n: (0, 0, 0)),    # w1 taps
                pl.BlockSpec((9, C, C), lambda n: (0, 0, 0)),    # w2 taps
                pl.BlockSpec((C, C), lambda n: (0, 0)),          # w3
                pl.BlockSpec((C, C), lambda n: (0, 0)),          # w4
                pl.BlockSpec((4, C, 1), lambda n: (0, 0, 0)),    # biases
            ],
            out_specs=pl.BlockSpec((1, C, HW), lambda n: (n, 0, 0)),
        ),
        compiler_params=pltpu.CompilerParams(
            dimension_semantics=("parallel",)),
    )(x3d, tap_masks, w1_9, w2_9, w3m, w4m, biases)

    return out3d.reshape(N, C, H, W)


# ---------------------------------------------------------------------------
# Pure-JAX reference (for correctness check)
# ---------------------------------------------------------------------------
def ref_forward(x, p):
    def conv(h, w, b, pad):
        y = jax.lax.conv_general_dilated(
            h, w, (1, 1), ((pad, pad), (pad, pad)),
            dimension_numbers=("NCHW", "OIHW", "NCHW"))
        return y + b[None, :, None, None]

    def inorm_relu(h):
        m = h.mean(axis=(2, 3), keepdims=True)
        v = ((h - m) ** 2).mean(axis=(2, 3), keepdims=True)
        return jnp.maximum((h - m) * jax.lax.rsqrt(v + EPS), 0.0)

    x1 = inorm_relu(conv(x, p["w1"], p["b1"], 1))
    x1 = inorm_relu(conv(x1, p["w2"], p["b2"], 1))
    x2 = inorm_relu(conv(x, p["w3"], p["b3"], 0))
    s = x1 + x2
    out = inorm_relu(conv(s, p["w4"], p["b4"], 0))
    return out + x


# ---------------------------------------------------------------------------
def init_params(key, C):
    """Deterministic Conv2d-style init (uniform +/- 1/sqrt(fan_in))."""
    ks = jax.random.split(key, 8)
    params = {}
    shapes = {
        "w1": (C, C, 3, 3), "b1": (C,),
        "w2": (C, C, 3, 3), "b2": (C,),
        "w3": (C, C, 1, 1), "b3": (C,),
        "w4": (C, C, 1, 1), "b4": (C,),
    }
    for i, (name, shape) in enumerate(shapes.items()):
        if name.startswith("w"):
            fan_in = shape[1] * shape[2] * shape[3]
        else:
            wshape = shapes["w" + name[1:]]
            fan_in = wshape[1] * wshape[2] * wshape[3]
        bound = 1.0 / np.sqrt(fan_in)
        params[name] = jax.random.uniform(
            ks[i], shape, jnp.float32, minval=-bound, maxval=bound)
    return params


if __name__ == "__main__":
    N, C, H, W = 2, 4, 16, 16
    key = jax.random.PRNGKey(0)
    k_x, k_p = jax.random.split(key)
    x = jax.random.normal(k_x, (N, C, H, W), jnp.float32)
    params = init_params(k_p, C)

    out = jax.block_until_ready(gsc2d_forward(x, params))
    ref = jax.block_until_ready(ref_forward(x, params))

    assert out.shape == (N, C, H, W)
    # Slightly relaxed rtol to absorb f32-MXU-matmul vs. XLA-conv rounding and
    # the E[h^2]-mean^2 variance form; still a tight functional check.
    np.testing.assert_allclose(np.asarray(out), np.asarray(ref),
                               rtol=1e-3, atol=1e-4)
    print("KERNEL_OK")
</pallas_src>

<mosaic_0001>
module attributes {stable_mosaic.version = 11 : i64} {
  func.func @_gsc2d_kernel(%arg0: i32, %arg1: memref<1x4x256xf32, #tpu.memory_space<vmem>>, %arg2: memref<9x1x256xf32, #tpu.memory_space<vmem>>, %arg3: memref<9x4x4xf32, #tpu.memory_space<vmem>>, %arg4: memref<9x4x4xf32, #tpu.memory_space<vmem>>, %arg5: memref<4x4xf32, #tpu.memory_space<vmem>>, %arg6: memref<4x4xf32, #tpu.memory_space<vmem>>, %arg7: memref<4x4x1xf32, #tpu.memory_space<vmem>>, %arg8: memref<1x4x256xf32, #tpu.memory_space<vmem>>) attributes {dimension_semantics = [#tpu.dimension_semantics<parallel>], iteration_bounds = array<i64: 2>, scalar_prefetch = 0 : i64, scratch_operands = 0 : i64, tpu.core_type = #tpu.core_type<tc>, window_params = [{transform_indices = @transform_0, window_bounds = array<i64: 1, 4, 256>}, {pipeline_mode = #tpu.pipeline_mode<synchronous>, transform_indices = @transform_1, window_bounds = array<i64: 9, 1, 256>}, {pipeline_mode = #tpu.pipeline_mode<synchronous>, transform_indices = @transform_2, window_bounds = array<i64: 9, 4, 4>}, {pipeline_mode = #tpu.pipeline_mode<synchronous>, transform_indices = @transform_3, window_bounds = array<i64: 9, 4, 4>}, {pipeline_mode = #tpu.pipeline_mode<synchronous>, transform_indices = @transform_4, window_bounds = array<i64: 4, 4>}, {pipeline_mode = #tpu.pipeline_mode<synchronous>, transform_indices = @transform_5, window_bounds = array<i64: 4, 4>}, {pipeline_mode = #tpu.pipeline_mode<synchronous>, transform_indices = @transform_6, window_bounds = array<i64: 4, 4, 1>}, {transform_indices = @transform_7, window_bounds = array<i64: 1, 4, 256>}]} {
    %c0 = arith.constant 0 : index
    %c0_0 = arith.constant 0 : index
    %c0_1 = arith.constant 0 : index
    %0 = vector.load %arg1[%c0, %c0_0, %c0_1] : memref<1x4x256xf32, #tpu.memory_space<vmem>>, vector<1x4x256xf32>
    %1 = vector.shape_cast %0 : vector<1x4x256xf32> to vector<4x256xf32>
    %c0_2 = arith.constant 0 : index
    %c0_3 = arith.constant 0 : index
    %c0_4 = arith.constant 0 : index
    %2 = vector.load %arg7[%c0_2, %c0_3, %c0_4] : memref<4x4x1xf32, #tpu.memory_space<vmem>>, vector<1x4x1xf32>
    %3 = vector.shape_cast %2 : vector<1x4x1xf32> to vector<4x1xf32>
    %c4 = arith.constant 4 : index
    %c0_5 = arith.constant 0 : index
    %c0_6 = arith.constant 0 : index
    %4 = vector.load %arg3[%c4, %c0_5, %c0_6] : memref<9x4x4xf32, #tpu.memory_space<vmem>>, vector<1x4x4xf32>
    %5 = vector.shape_cast %4 : vector<1x4x4xf32> to vector<4x4xf32>
    %cst = arith.constant dense<0.000000e+00> : vector<4x256xf32>
    %6 = tpu.matmul %5, %1, %cst {dimension_numbers = #tpu.dot_dimension_numbers<[1], [0], [0], [1], [0, 0, 1, 1], [], []>} : vector<4x4xf32>, vector<4x256xf32>, vector<4x256xf32> -> vector<4x256xf32>
    %c17_i32 = arith.constant 17 : i32
    %7 = tpu.dynamic_rotate %1 by %c17_i32 dim 1 : vector<4x256xf32>, i32 -> vector<4x256xf32>
    %c0_7 = arith.constant 0 : index
    %c0_8 = arith.constant 0 : index
    %c0_9 = arith.constant 0 : index
    %8 = vector.load %arg2[%c0_7, %c0_8, %c0_9] : memref<9x1x256xf32, #tpu.memory_space<vmem>>, vector<1x1x256xf32>
    %9 = vector.shape_cast %8 : vector<1x1x256xf32> to vector<1x256xf32>
    %10 = vector.broadcast %9 : vector<1x256xf32> to vector<4x256xf32>
    %11 = arith.mulf %7, %10 : vector<4x256xf32>
    %c0_10 = arith.constant 0 : index
    %c0_11 = arith.constant 0 : index
    %c0_12 = arith.constant 0 : index
    %12 = vector.load %arg3[%c0_10, %c0_11, %c0_12] : memref<9x4x4xf32, #tpu.memory_space<vmem>>, vector<1x4x4xf32>
    %13 = vector.shape_cast %12 : vector<1x4x4xf32> to vector<4x4xf32>
    %cst_13 = arith.constant dense<0.000000e+00> : vector<4x256xf32>
    %14 = tpu.matmul %13, %11, %cst_13 {dimension_numbers = #tpu.dot_dimension_numbers<[1], [0], [0], [1], [0, 0, 1, 1], [], []>} : vector<4x4xf32>, vector<4x256xf32>, vector<4x256xf32> -> vector<4x256xf32>
    %15 = arith.addf %6, %14 : vector<4x256xf32>
    %c16_i32 = arith.constant 16 : i32
    %16 = tpu.dynamic_rotate %1 by %c16_i32 dim 1 : vector<4x256xf32>, i32 -> vector<4x256xf32>
    %c1 = arith.constant 1 : index
    %c0_14 = arith.constant 0 : index
    %c0_15 = arith.constant 0 : index
    %17 = vector.load %arg2[%c1, %c0_14, %c0_15] : memref<9x1x256xf32, #tpu.memory_space<vmem>>, vector<1x1x256xf32>
    %18 = vector.shape_cast %17 : vector<1x1x256xf32> to vector<1x256xf32>
    %19 = vector.broadcast %18 : vector<1x256xf32> to vector<4x256xf32>
    %20 = arith.mulf %16, %19 : vector<4x256xf32>
    %c1_16 = arith.constant 1 : index
    %c0_17 = arith.constant 0 : index
    %c0_18 = arith.constant 0 : index
    %21 = vector.load %arg3[%c1_16, %c0_17, %c0_18] : memref<9x4x4xf32, #tpu.memory_space<vmem>>, vector<1x4x4xf32>
    %22 = vector.shape_cast %21 : vector<1x4x4xf32> to vector<4x4xf32>
    %cst_19 = arith.constant dense<0.000000e+00> : vector<4x256xf32>
    %23 = tpu.matmul %22, %20, %cst_19 {dimension_numbers = #tpu.dot_dimension_numbers<[1], [0], [0], [1], [0, 0, 1, 1], [], []>} : vector<4x4xf32>, vector<4x256xf32>, vector<4x256xf32> -> vector<4x256xf32>
    %24 = arith.addf %15, %23 : vector<4x256xf32>
    %c15_i32 = arith.constant 15 : i32
    %25 = tpu.dynamic_rotate %1 by %c15_i32 dim 1 : vector<4x256xf32>, i32 -> vector<4x256xf32>
    %c2 = arith.constant 2 : index
    %c0_20 = arith.constant 0 : index
    %c0_21 = arith.constant 0 : index
    %26 = vector.load %arg2[%c2, %c0_20, %c0_21] : memref<9x1x256xf32, #tpu.memory_space<vmem>>, vector<1x1x256xf32>
    %27 = vector.shape_cast %26 : vector<1x1x256xf32> to vector<1x256xf32>
    %28 = vector.broadcast %27 : vector<1x256xf32> to vector<4x256xf32>
    %29 = arith.mulf %25, %28 : vector<4x256xf32>
    %c2_22 = arith.constant 2 : index
    %c0_23 = arith.constant 0 : index
    %c0_24 = arith.constant 0 : index
    %30 = vector.load %arg3[%c2_22, %c0_23, %c0_24] : memref<9x4x4xf32, #tpu.memory_space<vmem>>, vector<1x4x4xf32>
    %31 = vector.shape_cast %30 : vector<1x4x4xf32> to vector<4x4xf32>
    %cst_25 = arith.constant dense<0.000000e+00> : vector<4x256xf32>
    %32 = tpu.matmul %31, %29, %cst_25 {dimension_numbers = #tpu.dot_dimension_numbers<[1], [0], [0], [1], [0, 0, 1, 1], [], []>} : vector<4x4xf32>, vector<4x256xf32>, vector<4x256xf32> -> vector<4x256xf32>
    %33 = arith.addf %24, %32 : vector<4x256xf32>
    %c1_i32 = arith.constant 1 : i32
    %34 = tpu.dynamic_rotate %1 by %c1_i32 dim 1 : vector<4x256xf32>, i32 -> vector<4x256xf32>
    %c3 = arith.constant 3 : index
    %c0_26 = arith.constant 0 : index
    %c0_27 = arith.constant 0 : index
    %35 = vector.load %arg2[%c3, %c0_26, %c0_27] : memref<9x1x256xf32, #tpu.memory_space<vmem>>, vector<1x1x256xf32>
    %36 = vector.shape_cast %35 : vector<1x1x256xf32> to vector<1x256xf32>
    %37 = vector.broadcast %36 : vector<1x256xf32> to vector<4x256xf32>
    %38 = arith.mulf %34, %37 : vector<4x256xf32>
    %c3_28 = arith.constant 3 : index
    %c0_29 = arith.constant 0 : index
    %c0_30 = arith.constant 0 : index
    %39 = vector.load %arg3[%c3_28, %c0_29, %c0_30] : memref<9x4x4xf32, #tpu.memory_space<vmem>>, vector<1x4x4xf32>
    %40 = vector.shape_cast %39 : vector<1x4x4xf32> to vector<4x4xf32>
    %cst_31 = arith.constant dense<0.000000e+00> : vector<4x256xf32>
    %41 = tpu.matmul %40, %38, %cst_31 {dimension_numbers = #tpu.dot_dimension_numbers<[1], [0], [0], [1], [0, 0, 1, 1], [], []>} : vector<4x4xf32>, vector<4x256xf32>, vector<4x256xf32> -> vector<4x256xf32>
    %42 = arith.addf %33, %41 : vector<4x256xf32>
    %c255_i32 = arith.constant 255 : i32
    %43 = tpu.dynamic_rotate %1 by %c255_i32 dim 1 : vector<4x256xf32>, i32 -> vector<4x256xf32>
    %c5 = arith.constant 5 : index
    %c0_32 = arith.constant 0 : index
    %c0_33 = arith.constant 0 : index
    %44 = vector.load %arg2[%c5, %c0_32, %c0_33] : memref<9x1x256xf32, #tpu.memory_space<vmem>>, vector<1x1x256xf32>
    %45 = vector.shape_cast %44 : vector<1x1x256xf32> to vector<1x256xf32>
    %46 = vector.broadcast %45 : vector<1x256xf32> to vector<4x256xf32>
    %47 = arith.mulf %43, %46 : vector<4x256xf32>
    %c5_34 = arith.constant 5 : index
    %c0_35 = arith.constant 0 : index
    %c0_36 = arith.constant 0 : index
    %48 = vector.load %arg3[%c5_34, %c0_35, %c0_36] : memref<9x4x4xf32, #tpu.memory_space<vmem>>, vector<1x4x4xf32>
    %49 = vector.shape_cast %48 : vector<1x4x4xf32> to vector<4x4xf32>
    %cst_37 = arith.constant dense<0.000000e+00> : vector<4x256xf32>
    %50 = tpu.matmul %49, %47, %cst_37 {dimension_numbers = #tpu.dot_dimension_numbers<[1], [0], [0], [1], [0, 0, 1, 1], [], []>} : vector<4x4xf32>, vector<4x256xf32>, vector<4x256xf32> -> vector<4x256xf32>
    %51 = arith.addf %42, %50 : vector<4x256xf32>
    %c241_i32 = arith.constant 241 : i32
    %52 = tpu.dynamic_rotate %1 by %c241_i32 dim 1 : vector<4x256xf32>, i32 -> vector<4x256xf32>
    %c6 = arith.constant 6 : index
    %c0_38 = arith.constant 0 : index
    %c0_39 = arith.constant 0 : index
    %53 = vector.load %arg2[%c6, %c0_38, %c0_39] : memref<9x1x256xf32, #tpu.memory_space<vmem>>, vector<1x1x256xf32>
    %54 = vector.shape_cast %53 : vector<1x1x256xf32> to vector<1x256xf32>
    %55 = vector.broadcast %54 : vector<1x256xf32> to vector<4x256xf32>
    %56 = arith.mulf %52, %55 : vector<4x256xf32>
    %c6_40 = arith.constant 6 : index
    %c0_41 = arith.constant 0 : index
    %c0_42 = arith.constant 0 : index
    %57 = vector.load %arg3[%c6_40, %c0_41, %c0_42] : memref<9x4x4xf32, #tpu.memory_space<vmem>>, vector<1x4x4xf32>
    %58 = vector.shape_cast %57 : vector<1x4x4xf32> to vector<4x4xf32>
    %cst_43 = arith.constant dense<0.000000e+00> : vector<4x256xf32>
    %59 = tpu.matmul %58, %56, %cst_43 {dimension_numbers = #tpu.dot_dimension_numbers<[1], [0], [0], [1], [0, 0, 1, 1], [], []>} : vector<4x4xf32>, vector<4x256xf32>, vector<4x256xf32> -> vector<4x256xf32>
    %60 = arith.addf %51, %59 : vector<4x256xf32>
    %c240_i32 = arith.constant 240 : i32
    %61 = tpu.dynamic_rotate %1 by %c240_i32 dim 1 : vector<4x256xf32>, i32 -> vector<4x256xf32>
    %c7 = arith.constant 7 : index
    %c0_44 = arith.constant 0 : index
    %c0_45 = arith.constant 0 : index
    %62 = vector.load %arg2[%c7, %c0_44, %c0_45] : memref<9x1x256xf32, #tpu.memory_space<vmem>>, vector<1x1x256xf32>
    %63 = vector.shape_cast %62 : vector<1x1x256xf32> to vector<1x256xf32>
    %64 = vector.broadcast %63 : vector<1x256xf32> to vector<4x256xf32>
    %65 = arith.mulf %61, %64 : vector<4x256xf32>
    %c7_46 = arith.constant 7 : index
    %c0_47 = arith.constant 0 : index
    %c0_48 = arith.constant 0 : index
    %66 = vector.load %arg3[%c7_46, %c0_47, %c0_48] : memref<9x4x4xf32, #tpu.memory_space<vmem>>, vector<1x4x4xf32>
    %67 = vector.shape_cast %66 : vector<1x4x4xf32> to vector<4x4xf32>
    %cst_49 = arith.constant dense<0.000000e+00> : vector<4x256xf32>
    %68 = tpu.matmul %67, %65, %cst_49 {dimension_numbers = #tpu.dot_dimension_numbers<[1], [0], [0], [1], [0, 0, 1, 1], [], []>} : vector<4x4xf32>, vector<4x256xf32>, vector<4x256xf32> -> vector<4x256xf32>
    %69 = arith.addf %60, %68 : vector<4x256xf32>
    %c239_i32 = arith.constant 239 : i32
    %70 = tpu.dynamic_rotate %1 by %c239_i32 dim 1 : vector<4x256xf32>, i32 -> vector<4x256xf32>
    %c8 = arith.constant 8 : index
    %c0_50 = arith.constant 0 : index
    %c0_51 = arith.constant 0 : index
    %71 = vector.load %arg2[%c8, %c0_50, %c0_51] : memref<9x1x256xf32, #tpu.memory_space<vmem>>, vector<1x1x256xf32>
    %72 = vector.shape_cast %71 : vector<1x1x256xf32> to vector<1x256xf32>
    %73 = vector.broadcast %72 : vector<1x256xf32> to vector<4x256xf32>
    %74 = arith.mulf %70, %73 : vector<4x256xf32>
    %c8_52 = arith.constant 8 : index
    %c0_53 = arith.constant 0 : index
    %c0_54 = arith.constant 0 : index
    %75 = vector.load %arg3[%c8_52, %c0_53, %c0_54] : memref<9x4x4xf32, #tpu.memory_space<vmem>>, vector<1x4x4xf32>
    %76 = vector.shape_cast %75 : vector<1x4x4xf32> to vector<4x4xf32>
    %cst_55 = arith.constant dense<0.000000e+00> : vector<4x256xf32>
    %77 = tpu.matmul %76, %74, %cst_55 {dimension_numbers = #tpu.dot_dimension_numbers<[1], [0], [0], [1], [0, 0, 1, 1], [], []>} : vector<4x4xf32>, vector<4x256xf32>, vector<4x256xf32> -> vector<4x256xf32>
    %78 = arith.addf %69, %77 : vector<4x256xf32>
    %79 = vector.broadcast %3 : vector<4x1xf32> to vector<4x256xf32>
    %80 = arith.addf %78, %79 : vector<4x256xf32>
    %cst_56 = arith.constant dense<0.000000e+00> : vector<4xf32>
    %81 = vector.multi_reduction <add>, %80, %cst_56 [1] : vector<4x256xf32> to vector<4xf32>
    %82 = vector.shape_cast %81 : vector<4xf32> to vector<4x1xf32>
    %83 = arith.mulf %80, %80 : vector<4x256xf32>
    %cst_57 = arith.constant dense<0.000000e+00> : vector<4xf32>
    %84 = vector.multi_reduction <add>, %83, %cst_57 [1] : vector<4x256xf32> to vector<4xf32>
    %85 = vector.shape_cast %84 : vector<4xf32> to vector<4x1xf32>
    %cst_58 = arith.constant 3.906250e-03 : f32
    %86 = vector.broadcast %cst_58 : f32 to vector<4x1xf32>
    %87 = arith.mulf %82, %86 : vector<4x1xf32>
    %cst_59 = arith.constant 3.906250e-03 : f32
    %88 = vector.broadcast %cst_59 : f32 to vector<4x1xf32>
    %89 = arith.mulf %85, %88 : vector<4x1xf32>
    %90 = arith.mulf %87, %87 : vector<4x1xf32>
    %91 = arith.subf %89, %90 : vector<4x1xf32>
    %cst_60 = arith.constant 9.99999974E-6 : f32
    %92 = vector.broadcast %cst_60 : f32 to vector<4x1xf32>
    %93 = arith.addf %91, %92 : vector<4x1xf32>
    %94 = math.rsqrt %93 : vector<4x1xf32>
    %95 = vector.broadcast %87 : vector<4x1xf32> to vector<4x256xf32>
    %96 = arith.subf %80, %95 : vector<4x256xf32>
    %97 = vector.broadcast %94 : vector<4x1xf32> to vector<4x256xf32>
    %98 = arith.mulf %96, %97 : vector<4x256xf32>
    %cst_61 = arith.constant 0.000000e+00 : f32
    %99 = vector.broadcast %cst_61 : f32 to vector<4x256xf32>
    %100 = arith.maximumf %98, %99 : vector<4x256xf32>
    %c1_62 = arith.constant 1 : index
    %c0_63 = arith.constant 0 : index
    %c0_64 = arith.constant 0 : index
    %101 = vector.load %arg7[%c1_62, %c0_63, %c0_64] : memref<4x4x1xf32, #tpu.memory_space<vmem>>, vector<1x4x1xf32>
    %102 = vector.shape_cast %101 : vector<1x4x1xf32> to vector<4x1xf32>
    %c4_65 = arith.constant 4 : index
    %c0_66 = arith.constant 0 : index
    %c0_67 = arith.constant 0 : index
    %103 = vector.load %arg4[%c4_65, %c0_66, %c0_67] : memref<9x4x4xf32, #tpu.memory_space<vmem>>, vector<1x4x4xf32>
    %104 = vector.shape_cast %103 : vector<1x4x4xf32> to vector<4x4xf32>
    %cst_68 = arith.constant dense<0.000000e+00> : vector<4x256xf32>
    %105 = tpu.matmul %104, %100, %cst_68 {dimension_numbers = #tpu.dot_dimension_numbers<[1], [0], [0], [1], [0, 0, 1, 1], [], []>} : vector<4x4xf32>, vector<4x256xf32>, vector<4x256xf32> -> vector<4x256xf32>
    %c17_i32_69 = arith.constant 17 : i32
    %106 = tpu.dynamic_rotate %100 by %c17_i32_69 dim 1 : vector<4x256xf32>, i32 -> vector<4x256xf32>
    %c0_70 = arith.constant 0 : index
    %c0_71 = arith.constant 0 : index
    %c0_72 = arith.constant 0 : index
    %107 = vector.load %arg2[%c0_70, %c0_71, %c0_72] : memref<9x1x256xf32, #tpu.memory_space<vmem>>, vector<1x1x256xf32>
    %108 = vector.shape_cast %107 : vector<1x1x256xf32> to vector<1x256xf32>
    %109 = vector.broadcast %108 : vector<1x256xf32> to vector<4x256xf32>
    %110 = arith.mulf %106, %109 : vector<4x256xf32>
    %c0_73 = arith.constant 0 : index
    %c0_74 = arith.constant 0 : index
    %c0_75 = arith.constant 0 : index
    %111 = vector.load %arg4[%c0_73, %c0_74, %c0_75] : memref<9x4x4xf32, #tpu.memory_space<vmem>>, vector<1x4x4xf32>
    %112 = vector.shape_cast %111 : vector<1x4x4xf32> to vector<4x4xf32>
    %cst_76 = arith.constant dense<0.000000e+00> : vector<4x256xf32>
    %113 = tpu.matmul %112, %110, %cst_76 {dimension_numbers = #tpu.dot_dimension_numbers<[1], [0], [0], [1], [0, 0, 1, 1], [], []>} : vector<4x4xf32>, vector<4x256xf32>, vector<4x256xf32> -> vector<4x256xf32>
    %114 = arith.addf %105, %113 : vector<4x256xf32>
    %c16_i32_77 = arith.constant 16 : i32
    %115 = tpu.dynamic_rotate %100 by %c16_i32_77 dim 1 : vector<4x256xf32>, i32 -> vector<4x256xf32>
    %c1_78 = arith.constant 1 : index
    %c0_79 = arith.constant 0 : index
    %c0_80 = arith.constant 0 : index
    %116 = vector.load %arg2[%c1_78, %c0_79, %c0_80] : memref<9x1x256xf32, #tpu.memory_space<vmem>>, vector<1x1x256xf32>
    %117 = vector.shape_cast %116 : vector<1x1x256xf32> to vector<1x256xf32>
    %118 = vector.broadcast %117 : vector<1x256xf32> to vector<4x256xf32>
    %119 = arith.mulf %115, %118 : vector<4x256xf32>
    %c1_81 = arith.constant 1 : index
    %c0_82 = arith.constant 0 : index
    %c0_83 = arith.constant 0 : index
    %120 = vector.load %arg4[%c1_81, %c0_82, %c0_83] : memref<9x4x4xf32, #tpu.memory_space<vmem>>, vector<1x4x4xf32>
    %121 = vector.shape_cast %120 : vector<1x4x4xf32> to vector<4x4xf32>
    %cst_84 = arith.constant dense<0.000000e+00> : vector<4x256xf32>
    %122 = tpu.matmul %121, %119, %cst_84 {dimension_numbers = #tpu.dot_dimension_numbers<[1], [0], [0], [1], [0, 0, 1, 1], [], []>} : vector<4x4xf32>, vector<4x256xf32>, vector<4x256xf32> -> vector<4x256xf32>
    %123 = arith.addf %114, %122 : vector<4x256xf32>
    %c15_i32_85 = arith.constant 15 : i32
    %124 = tpu.dynamic_rotate %100 by %c15_i32_85 dim 1 : vector<4x256xf32>, i32 -> vector<4x256xf32>
    %c2_86 = arith.constant 2 : index
    %c0_87 = arith.constant 0 : index
    %c0_88 = arith.constant 0 : index
    %125 = vector.load %arg2[%c2_86, %c0_87, %c0_88] : memref<9x1x256xf32, #tpu.memory_space<vmem>>, vector<1x1x256xf32>
    %126 = vector.shape_cast %125 : vector<1x1x256xf32> to vector<1x256xf32>
    %127 = vector.broadcast %126 : vector<1x256xf32> to vector<4x256xf32>
    %128 = arith.mulf %124, %127 : vector<4x256xf32>
    %c2_89 = arith.constant 2 : index
    %c0_90 = arith.constant 0 : index
    %c0_91 = arith.constant 0 : index
    %129 = vector.load %arg4[%c2_89, %c0_90, %c0_91] : memref<9x4x4xf32, #tpu.memory_space<vmem>>, vector<1x4x4xf32>
    %130 = vector.shape_cast %129 : vector<1x4x4xf32> to vector<4x4xf32>
    %cst_92 = arith.constant dense<0.000000e+00> : vector<4x256xf32>
    %131 = tpu.matmul %130, %128, %cst_92 {dimension_numbers = #tpu.dot_dimension_numbers<[1], [0], [0], [1], [0, 0, 1, 1], [], []>} : vector<4x4xf32>, vector<4x256xf32>, vector<4x256xf32> -> vector<4x256xf32>
    %132 = arith.addf %123, %131 : vector<4x256xf32>
    %c1_i32_93 = arith.constant 1 : i32
    %133 = tpu.dynamic_rotate %100 by %c1_i32_93 dim 1 : vector<4x256xf32>, i32 -> vector<4x256xf32>
    %c3_94 = arith.constant 3 : index
    %c0_95 = arith.constant 0 : index
    %c0_96 = arith.constant 0 : index
    %134 = vector.load %arg2[%c3_94, %c0_95, %c0_96] : memref<9x1x256xf32, #tpu.memory_space<vmem>>, vector<1x1x256xf32>
    %135 = vector.shape_cast %134 : vector<1x1x256xf32> to vector<1x256xf32>
    %136 = vector.broadcast %135 : vector<1x256xf32> to vector<4x256xf32>
    %137 = arith.mulf %133, %136 : vector<4x256xf32>
    %c3_97 = arith.constant 3 : index
    %c0_98 = arith.constant 0 : index
    %c0_99 = arith.constant 0 : index
    %138 = vector.load %arg4[%c3_97, %c0_98, %c0_99] : memref<9x4x4xf32, #tpu.memory_space<vmem>>, vector<1x4x4xf32>
    %139 = vector.shape_cast %138 : vector<1x4x4xf32> to vector<4x4xf32>
    %cst_100 = arith.constant dense<0.000000e+00> : vector<4x256xf32>
    %140 = tpu.matmul %139, %137, %cst_100 {dimension_numbers = #tpu.dot_dimension_numbers<[1], [0], [0], [1], [0, 0, 1, 1], [], []>} : vector<4x4xf32>, vector<4x256xf32>, vector<4x256xf32> -> vector<4x256xf32>
    %141 = arith.addf %132, %140 : vector<4x256xf32>
    %c255_i32_101 = arith.constant 255 : i32
    %142 = tpu.dynamic_rotate %100 by %c255_i32_101 dim 1 : vector<4x256xf32>, i32 -> vector<4x256xf32>
    %c5_102 = arith.constant 5 : index
    %c0_103 = arith.constant 0 : index
    %c0_104 = arith.constant 0 : index
    %143 = vector.load %arg2[%c5_102, %c0_103, %c0_104] : memref<9x1x256xf32, #tpu.memory_space<vmem>>, vector<1x1x256xf32>
    %144 = vector.shape_cast %143 : vector<1x1x256xf32> to vector<1x256xf32>
    %145 = vector.broadcast %144 : vector<1x256xf32> to vector<4x256xf32>
    %146 = arith.mulf %142, %145 : vector<4x256xf32>
    %c5_105 = arith.constant 5 : index
    %c0_106 = arith.constant 0 : index
    %c0_107 = arith.constant 0 : index
    %147 = vector.load %arg4[%c5_105, %c0_106, %c0_107] : memref<9x4x4xf32, #tpu.memory_space<vmem>>, vector<1x4x4xf32>
    %148 = vector.shape_cast %147 : vector<1x4x4xf32> to vector<4x4xf32>
    %cst_108 = arith.constant dense<0.000000e+00> : vector<4x256xf32>
    %149 = tpu.matmul %148, %146, %cst_108 {dimension_numbers = #tpu.dot_dimension_numbers<[1], [0], [0], [1], [0, 0, 1, 1], [], []>} : vector<4x4xf32>, vector<4x256xf32>, vector<4x256xf32> -> vector<4x256xf32>
    %150 = arith.addf %141, %149 : vector<4x256xf32>
    %c241_i32_109 = arith.constant 241 : i32
    %151 = tpu.dynamic_rotate %100 by %c241_i32_109 dim 1 : vector<4x256xf32>, i32 -> vector<4x256xf32>
    %c6_110 = arith.constant 6 : index
    %c0_111 = arith.constant 0 : index
    %c0_112 = arith.constant 0 : index
    %152 = vector.load %arg2[%c6_110, %c0_111, %c0_112] : memref<9x1x256xf32, #tpu.memory_space<vmem>>, vector<1x1x256xf32>
    %153 = vector.shape_cast %152 : vector<1x1x256xf32> to vector<1x256xf32>
    %154 = vector.broadcast %153 : vector<1x256xf32> to vector<4x256xf32>
    %155 = arith.mulf %151, %154 : vector<4x256xf32>
    %c6_113 = arith.constant 6 : index
    %c0_114 = arith.constant 0 : index
    %c0_115 = arith.constant 0 : index
    %156 = vector.load %arg4[%c6_113, %c0_114, %c0_115] : memref<9x4x4xf32, #tpu.memory_space<vmem>>, vector<1x4x4xf32>
    %157 = vector.shape_cast %156 : vector<1x4x4xf32> to vector<4x4xf32>
    %cst_116 = arith.constant dense<0.000000e+00> : vector<4x256xf32>
    %158 = tpu.matmul %157, %155, %cst_116 {dimension_numbers = #tpu.dot_dimension_numbers<[1], [0], [0], [1], [0, 0, 1, 1], [], []>} : vector<4x4xf32>, vector<4x256xf32>, vector<4x256xf32> -> vector<4x256xf32>
    %159 = arith.addf %150, %158 : vector<4x256xf32>
    %c240_i32_117 = arith.constant 240 : i32
    %160 = tpu.dynamic_rotate %100 by %c240_i32_117 dim 1 : vector<4x256xf32>, i32 -> vector<4x256xf32>
    %c7_118 = arith.constant 7 : index
    %c0_119 = arith.constant 0 : index
    %c0_120 = arith.constant 0 : index
    %161 = vector.load %arg2[%c7_118, %c0_119, %c0_120] : memref<9x1x256xf32, #tpu.memory_space<vmem>>, vector<1x1x256xf32>
    %162 = vector.shape_cast %161 : vector<1x1x256xf32> to vector<1x256xf32>
    %163 = vector.broadcast %162 : vector<1x256xf32> to vector<4x256xf32>
    %164 = arith.mulf %160, %163 : vector<4x256xf32>
    %c7_121 = arith.constant 7 : index
    %c0_122 = arith.constant 0 : index
    %c0_123 = arith.constant 0 : index
    %165 = vector.load %arg4[%c7_121, %c0_122, %c0_123] : memref<9x4x4xf32, #tpu.memory_space<vmem>>, vector<1x4x4xf32>
    %166 = vector.shape_cast %165 : vector<1x4x4xf32> to vector<4x4xf32>
    %cst_124 = arith.constant dense<0.000000e+00> : vector<4x256xf32>
    %167 = tpu.matmul %166, %164, %cst_124 {dimension_numbers = #tpu.dot_dimension_numbers<[1], [0], [0], [1], [0, 0, 1, 1], [], []>} : vector<4x4xf32>, vector<4x256xf32>, vector<4x256xf32> -> vector<4x256xf32>
    %168 = arith.addf %159, %167 : vector<4x256xf32>
    %c239_i32_125 = arith.constant 239 : i32
    %169 = tpu.dynamic_rotate %100 by %c239_i32_125 dim 1 : vector<4x256xf32>, i32 -> vector<4x256xf32>
    %c8_126 = arith.constant 8 : index
    %c0_127 = arith.constant 0 : index
    %c0_128 = arith.constant 0 : index
    %170 = vector.load %arg2[%c8_126, %c0_127, %c0_128] : memref<9x1x256xf32, #tpu.memory_space<vmem>>, vector<1x1x256xf32>
    %171 = vector.shape_cast %170 : vector<1x1x256xf32> to vector<1x256xf32>
    %172 = vector.broadcast %171 : vector<1x256xf32> to vector<4x256xf32>
    %173 = arith.mulf %169, %172 : vector<4x256xf32>
    %c8_129 = arith.constant 8 : index
    %c0_130 = arith.constant 0 : index
    %c0_131 = arith.constant 0 : index
    %174 = vector.load %arg4[%c8_129, %c0_130, %c0_131] : memref<9x4x4xf32, #tpu.memory_space<vmem>>, vector<1x4x4xf32>
    %175 = vector.shape_cast %174 : vector<1x4x4xf32> to vector<4x4xf32>
    %cst_132 = arith.constant dense<0.000000e+00> : vector<4x256xf32>
    %176 = tpu.matmul %175, %173, %cst_132 {dimension_numbers = #tpu.dot_dimension_numbers<[1], [0], [0], [1], [0, 0, 1, 1], [], []>} : vector<4x4xf32>, vector<4x256xf32>, vector<4x256xf32> -> vector<4x256xf32>
    %177 = arith.addf %168, %176 : vector<4x256xf32>
    %178 = vector.broadcast %102 : vector<4x1xf32> to vector<4x256xf32>
    %179 = arith.addf %177, %178 : vector<4x256xf32>
    %cst_133 = arith.constant dense<0.000000e+00> : vector<4xf32>
    %180 = vector.multi_reduction <add>, %179, %cst_133 [1] : vector<4x256xf32> to vector<4xf32>
    %181 = vector.shape_cast %180 : vector<4xf32> to vector<4x1xf32>
    %182 = arith.mulf %179, %179 : vector<4x256xf32>
    %cst_134 = arith.constant dense<0.000000e+00> : vector<4xf32>
    %183 = vector.multi_reduction <add>, %182, %cst_134 [1] : vector<4x256xf32> to vector<4xf32>
    %184 = vector.shape_cast %183 : vector<4xf32> to vector<4x1xf32>
    %cst_135 = arith.constant 3.906250e-03 : f32
    %185 = vector.broadcast %cst_135 : f32 to vector<4x1xf32>
    %186 = arith.mulf %181, %185 : vector<4x1xf32>
    %cst_136 = arith.constant 3.906250e-03 : f32
    %187 = vector.broadcast %cst_136 : f32 to vector<4x1xf32>
    %188 = arith.mulf %184, %187 : vector<4x1xf32>
    %189 = arith.mulf %186, %186 : vector<4x1xf32>
    %190 = arith.subf %188, %189 : vector<4x1xf32>
    %cst_137 = arith.constant 9.99999974E-6 : f32
    %191 = vector.broadcast %cst_137 : f32 to vector<4x1xf32>
    %192 = arith.addf %190, %191 : vector<4x1xf32>
    %193 = math.rsqrt %192 : vector<4x1xf32>
    %194 = vector.broadcast %186 : vector<4x1xf32> to vector<4x256xf32>
    %195 = arith.subf %179, %194 : vector<4x256xf32>
    %196 = vector.broadcast %193 : vector<4x1xf32> to vector<4x256xf32>
    %197 = arith.mulf %195, %196 : vector<4x256xf32>
    %cst_138 = arith.constant 0.000000e+00 : f32
    %198 = vector.broadcast %cst_138 : f32 to vector<4x256xf32>
    %199 = arith.maximumf %197, %198 : vector<4x256xf32>
    %c2_139 = arith.constant 2 : index
    %c0_140 = arith.constant 0 : index
    %c0_141 = arith.constant 0 : index
    %200 = vector.load %arg7[%c2_139, %c0_140, %c0_141] : memref<4x4x1xf32, #tpu.memory_space<vmem>>, vector<1x4x1xf32>
    %201 = vector.shape_cast %200 : vector<1x4x1xf32> to vector<4x1xf32>
    %c0_142 = arith.constant 0 : index
    %c0_143 = arith.constant 0 : index
    %202 = vector.load %arg5[%c0_142, %c0_143] : memref<4x4xf32, #tpu.memory_space<vmem>>, vector<4x4xf32>
    %cst_144 = arith.constant dense<0.000000e+00> : vector<4x256xf32>
    %203 = tpu.matmul %202, %1, %cst_144 {dimension_numbers = #tpu.dot_dimension_numbers<[1], [0], [0], [1], [0, 0, 1, 1], [], []>} : vector<4x4xf32>, vector<4x256xf32>, vector<4x256xf32> -> vector<4x256xf32>
    %204 = vector.broadcast %201 : vector<4x1xf32> to vector<4x256xf32>
    %205 = arith.addf %203, %204 : vector<4x256xf32>
    %cst_145 = arith.constant dense<0.000000e+00> : vector<4xf32>
    %206 = vector.multi_reduction <add>, %205, %cst_145 [1] : vector<4x256xf32> to vector<4xf32>
    %207 = vector.shape_cast %206 : vector<4xf32> to vector<4x1xf32>
    %208 = arith.mulf %205, %205 : vector<4x256xf32>
    %cst_146 = arith.constant dense<0.000000e+00> : vector<4xf32>
    %209 = vector.multi_reduction <add>, %208, %cst_146 [1] : vector<4x256xf32> to vector<4xf32>
    %210 = vector.shape_cast %209 : vector<4xf32> to vector<4x1xf32>
    %cst_147 = arith.constant 3.906250e-03 : f32
    %211 = vector.broadcast %cst_147 : f32 to vector<4x1xf32>
    %212 = arith.mulf %207, %211 : vector<4x1xf32>
    %cst_148 = arith.constant 3.906250e-03 : f32
    %213 = vector.broadcast %cst_148 : f32 to vector<4x1xf32>
    %214 = arith.mulf %210, %213 : vector<4x1xf32>
    %215 = arith.mulf %212, %212 : vector<4x1xf32>
    %216 = arith.subf %214, %215 : vector<4x1xf32>
    %cst_149 = arith.constant 9.99999974E-6 : f32
    %217 = vector.broadcast %cst_149 : f32 to vector<4x1xf32>
    %218 = arith.addf %216, %217 : vector<4x1xf32>
    %219 = math.rsqrt %218 : vector<4x1xf32>
    %220 = vector.broadcast %212 : vector<4x1xf32> to vector<4x256xf32>
    %221 = arith.subf %205, %220 : vector<4x256xf32>
    %222 = vector.broadcast %219 : vector<4x1xf32> to vector<4x256xf32>
    %223 = arith.mulf %221, %222 : vector<4x256xf32>
    %cst_150 = arith.constant 0.000000e+00 : f32
    %224 = vector.broadcast %cst_150 : f32 to vector<4x256xf32>
    %225 = arith.maximumf %223, %224 : vector<4x256xf32>
    %226 = arith.addf %199, %225 : vector<4x256xf32>
    %c3_151 = arith.constant 3 : index
    %c0_152 = arith.constant 0 : index
    %c0_153 = arith.constant 0 : index
    %227 = vector.load %arg7[%c3_151, %c0_152, %c0_153] : memref<4x4x1xf32, #tpu.memory_space<vmem>>, vector<1x4x1xf32>
    %228 = vector.shape_cast %227 : vector<1x4x1xf32> to vector<4x1xf32>
    %c0_154 = arith.constant 0 : index
    %c0_155 = arith.constant 0 : index
    %229 = vector.load %arg6[%c0_154, %c0_155] : memref<4x4xf32, #tpu.memory_space<vmem>>, vector<4x4xf32>
    %cst_156 = arith.constant dense<0.000000e+00> : vector<4x256xf32>
    %230 = tpu.matmul %229, %226, %cst_156 {dimension_numbers = #tpu.dot_dimension_numbers<[1], [0], [0], [1], [0, 0, 1, 1], [], []>} : vector<4x4xf32>, vector<4x256xf32>, vector<4x256xf32> -> vector<4x256xf32>
    %231 = vector.broadcast %228 : vector<4x1xf32> to vector<4x256xf32>
    %232 = arith.addf %230, %231 : vector<4x256xf32>
    %cst_157 = arith.constant dense<0.000000e+00> : vector<4xf32>
    %233 = vector.multi_reduction <add>, %232, %cst_157 [1] : vector<4x256xf32> to vector<4xf32>
    %234 = vector.shape_cast %233 : vector<4xf32> to vector<4x1xf32>
    %235 = arith.mulf %232, %232 : vector<4x256xf32>
    %cst_158 = arith.constant dense<0.000000e+00> : vector<4xf32>
    %236 = vector.multi_reduction <add>, %235, %cst_158 [1] : vector<4x256xf32> to vector<4xf32>
    %237 = vector.shape_cast %236 : vector<4xf32> to vector<4x1xf32>
    %cst_159 = arith.constant 3.906250e-03 : f32
    %238 = vector.broadcast %cst_159 : f32 to vector<4x1xf32>
    %239 = arith.mulf %234, %238 : vector<4x1xf32>
    %cst_160 = arith.constant 3.906250e-03 : f32
    %240 = vector.broadcast %cst_160 : f32 to vector<4x1xf32>
    %241 = arith.mulf %237, %240 : vector<4x1xf32>
    %242 = arith.mulf %239, %239 : vector<4x1xf32>
    %243 = arith.subf %241, %242 : vector<4x1xf32>
    %cst_161 = arith.constant 9.99999974E-6 : f32
    %244 = vector.broadcast %cst_161 : f32 to vector<4x1xf32>
    %245 = arith.addf %243, %244 : vector<4x1xf32>
    %246 = math.rsqrt %245 : vector<4x1xf32>
    %247 = vector.broadcast %239 : vector<4x1xf32> to vector<4x256xf32>
    %248 = arith.subf %232, %247 : vector<4x256xf32>
    %249 = vector.broadcast %246 : vector<4x1xf32> to vector<4x256xf32>
    %250 = arith.mulf %248, %249 : vector<4x256xf32>
    %cst_162 = arith.constant 0.000000e+00 : f32
    %251 = vector.broadcast %cst_162 : f32 to vector<4x256xf32>
    %252 = arith.maximumf %250, %251 : vector<4x256xf32>
    %253 = arith.addf %252, %1 : vector<4x256xf32>
    %c0_163 = arith.constant 0 : index
    %c0_164 = arith.constant 0 : index
    %c0_165 = arith.constant 0 : index
    %254 = vector.load %arg8[%c0_163, %c0_164, %c0_165] : memref<1x4x256xf32, #tpu.memory_space<vmem>>, vector<1x4x256xf32>
    %255 = vector.shape_cast %254 : vector<1x4x256xf32> to vector<4x256xf32>
    %256 = vector.shape_cast %253 : vector<4x256xf32> to vector<1x4x256xf32>
    tpu.vector_store %arg8[%c0_163, %c0_164, %c0_165], %256 {strides = array<i32>} : memref<1x4x256xf32, #tpu.memory_space<vmem>>, vector<1x4x256xf32>,
    return
  }
  func.func @transform_0(%arg0: i32) -> (i32, i32, i32) {
    %c0_i32 = arith.constant 0 : i32
    %c0_i32_0 = arith.constant 0 : i32
    %c0_i32_1 = arith.constant 0 : i32
    return %arg0, %c0_i32, %c0_i32_0 : i32, i32, i32
  }
  func.func @transform_1(%arg0: i32) -> (i32, i32, i32) {
    %c0_i32 = arith.constant 0 : i32
    %c0_i32_0 = arith.constant 0 : i32
    %c0_i32_1 = arith.constant 0 : i32
    %c0_i32_2 = arith.constant 0 : i32
    return %c0_i32, %c0_i32_0, %c0_i32_1 : i32, i32, i32
  }
  func.func @transform_2(%arg0: i32) -> (i32, i32, i32) {
    %c0_i32 = arith.constant 0 : i32
    %c0_i32_0 = arith.constant 0 : i32
    %c0_i32_1 = arith.constant 0 : i32
    %c0_i32_2 = arith.constant 0 : i32
    return %c0_i32, %c0_i32_0, %c0_i32_1 : i32, i32, i32
  }
  func.func @transform_3(%arg0: i32) -> (i32, i32, i32) {
    %c0_i32 = arith.constant 0 : i32
    %c0_i32_0 = arith.constant 0 : i32
    %c0_i32_1 = arith.constant 0 : i32
    %c0_i32_2 = arith.constant 0 : i32
    return %c0_i32, %c0_i32_0, %c0_i32_1 : i32, i32, i32
  }
  func.func @transform_4(%arg0: i32) -> (i32, i32) {
    %c0_i32 = arith.constant 0 : i32
    %c0_i32_0 = arith.constant 0 : i32
    %c0_i32_1 = arith.constant 0 : i32
    return %c0_i32, %c0_i32_0 : i32, i32
  }
  func.func @transform_5(%arg0: i32) -> (i32, i32) {
    %c0_i32 = arith.constant 0 : i32
    %c0_i32_0 = arith.constant 0 : i32
    %c0_i32_1 = arith.constant 0 : i32
    return %c0_i32, %c0_i32_0 : i32, i32
  }
  func.func @transform_6(%arg0: i32) -> (i32, i32, i32) {
    %c0_i32 = arith.constant 0 : i32
    %c0_i32_0 = arith.constant 0 : i32
    %c0_i32_1 = arith.constant 0 : i32
    %c0_i32_2 = arith.constant 0 : i32
    return %c0_i32, %c0_i32_0, %c0_i32_1 : i32, i32, i32
  }
  func.func @transform_7(%arg0: i32) -> (i32, i32, i32) {
    %c0_i32 = arith.constant 0 : i32
    %c0_i32_0 = arith.constant 0 : i32
    %c0_i32_1 = arith.constant 0 : i32
    return %arg0, %c0_i32, %c0_i32_0 : i32, i32, i32
  }
}

</mosaic_0001>

<llo_original>
// kernel: gsc2d_forward.1
$region0: #{gsc2d_forward.1}
  #allocation0 [shape = 'u32[]', space=smem, size = 0x4, offset = 0x4, fixed_abs, tag = 'smem constant byte address 0x4 - core index']
  #allocation1 [shape = 'u32[144,128]{1,0:T(1,128)}', space=vmem, size = 0x12000, scoped, tag = 'internal scratch']
  %s0 = inlined_call_operand.vmem [shape: f32[2,4,256], index: 0, kind: input, shape index: {}]
  %s1 = inlined_call_operand.vmem [shape: f32[9,1,256], index: 1, kind: input, shape index: {}]
  %s2 = inlined_call_operand.vmem [shape: f32[9,4,4], index: 2, kind: input, shape index: {}]
  %s3 = inlined_call_operand.vmem [shape: f32[9,4,4], index: 3, kind: input, shape index: {}]
  %s4 = inlined_call_operand.vmem [shape: f32[4,4], index: 4, kind: input, shape index: {}]
  %s5 = inlined_call_operand.vmem [shape: f32[4,4], index: 5, kind: input, shape index: {}]
  %s6 = inlined_call_operand.vmem [shape: f32[4,4,1], index: 6, kind: input, shape index: {}]
  %s7 = inlined_call_operand.vmem [shape: f32[2,4,256], index: 7, kind: output, shape index: {}]
  %s8 = sld [smem:[#allocation0]]
  $region61: #{gsc2d_forward.1} parent=0
    _
  %s10 = ssub.s32 1, %s8
  %s11 = scalar_select 0, %s10, %s8
  loop: start=0, step=1, limit=4
  $region2: #{gsc2d_forward.1} parent=0 // loop_pre_header
    _
  $region3: #{gsc2d_forward.1} parent=0 // loop_header
    %s13 = sphi 0, %s17
    %p14 = scmp.ge.s32.totalorder %s13, 4
    %s23 = sphi 0, %s25
    %s26 = sphi 0, %s23
    %s27 = sphi 0, %s26
    %s43 = sphi 0, %s27
    %s47 = sphi 0, %s47
    %s49 = sphi 0, %s47
    %s50 = sphi 0, %s49
    %s64 = sphi 0, %s50
    %s68 = sphi 0, %s68
    %s70 = sphi 0, %s68
    %s71 = sphi 0, %s70
    %s85 = sphi 0, %s71
    %s89 = sphi 0, %s89
    %s91 = sphi 0, %s89
    %s92 = sphi 0, %s91
    %s106 = sphi 0, %s92
    %s110 = sphi 0, %s110
    %s112 = sphi 0, %s110
    %s113 = sphi 0, %s112
    %s127 = sphi 0, %s113
    %s131 = sphi 0, %s131
    %s133 = sphi 0, %s131
    %s134 = sphi 0, %s133
    %s148 = sphi 0, %s134
    %s152 = sphi 0, %s152
    %s154 = sphi 0, %s152
    %s155 = sphi 0, %s154
    %s169 = sphi 0, %s155
    %s175 = sphi 0, %s177
    %s178 = sphi 0, %s175
    %s179 = sphi 0, %s178
    %s195 = sphi 0, %s179
  $region4: #{gsc2d_forward.1} parent=0 // loop_header_branch
    %16 = sbr.rel (%p14) target = $region8
  $region5: #{gsc2d_forward.1} parent=0 // loop_body
    %s18 = ssub.s32 %s13, 1
    %s19 = ssub.s32 %s13, 2
    %s20 = sadd.s32 %s13, 1
    %s21 = ssub.s32 %s13, %s20
    %p22 = scmp.eq.s32.totalorder %s21, 0
    %s24 = sadd.s32 %s23, 1
    %s25 = scalar_select %p22, %s23, %s24
    %p28 = pneg %p22
    %p29 = scmp.eq.s32.totalorder %s13, 1
    %p30 = por %p28, %p29
    %p31 = scmp.ne.s32.totalorder %s23, %s26
    %p32 = scmp.eq.s32.totalorder %s13, 0
    %p33 = por %p31, %p32
    %p34 = scmp.ne.s32.totalorder %s23, %s26
    %p35 = scmp.eq.s32.totalorder %s18, 1
    %p36 = por %p34, %p35
    %p37 = scmp.ne.s32.totalorder %s26, %s27
    %p38 = scmp.eq.s32.totalorder %s18, 0
    %p39 = por %p37, %p38
    %p40 = scmp.ne.s32.totalorder %s26, %s27
    %p41 = scmp.eq.s32.totalorder %s19, 1
    %p42 = por %p40, %p41
    %p44 = scmp.ne.s32.totalorder %s27, %s43
    %p45 = scmp.eq.s32.totalorder %s19, 0
    %p46 = por %p44, %p45
    %s48 = sadd.s32 %s47, 1
    %p51 = scmp.eq.s32.totalorder %s13, 1
    %p52 = scmp.ne.s32.totalorder %s47, %s49
    %p53 = scmp.eq.s32.totalorder %s13, 0
    %p54 = por %p52, %p53
    %p55 = scmp.ne.s32.totalorder %s47, %s49
    %p56 = scmp.eq.s32.totalorder %s18, 1
    %p57 = por %p55, %p56
    %p58 = scmp.ne.s32.totalorder %s49, %s50
    %p59 = scmp.eq.s32.totalorder %s18, 0
    %p60 = por %p58, %p59
    %p61 = scmp.ne.s32.totalorder %s49, %s50
    %p62 = scmp.eq.s32.totalorder %s19, 1
    %p63 = por %p61, %p62
    %p65 = scmp.ne.s32.totalorder %s50, %s64
    %p66 = scmp.eq.s32.totalorder %s19, 0
    %p67 = por %p65, %p66
    %s69 = sadd.s32 %s68, 1
    %p72 = scmp.eq.s32.totalorder %s13, 1
    %p73 = scmp.ne.s32.totalorder %s68, %s70
    %p74 = scmp.eq.s32.totalorder %s13, 0
    %p75 = por %p73, %p74
    %p76 = scmp.ne.s32.totalorder %s68, %s70
    %p77 = scmp.eq.s32.totalorder %s18, 1
    %p78 = por %p76, %p77
    %p79 = scmp.ne.s32.totalorder %s70, %s71
    %p80 = scmp.eq.s32.totalorder %s18, 0
    %p81 = por %p79, %p80
    %p82 = scmp.ne.s32.totalorder %s70, %s71
    %p83 = scmp.eq.s32.totalorder %s19, 1
    %p84 = por %p82, %p83
    %p86 = scmp.ne.s32.totalorder %s71, %s85
    %p87 = scmp.eq.s32.totalorder %s19, 0
    %p88 = por %p86, %p87
    %s90 = sadd.s32 %s89, 1
    %p93 = scmp.eq.s32.totalorder %s13, 1
    %p94 = scmp.ne.s32.totalorder %s89, %s91
    %p95 = scmp.eq.s32.totalorder %s13, 0
    %p96 = por %p94, %p95
    %p97 = scmp.ne.s32.totalorder %s89, %s91
    %p98 = scmp.eq.s32.totalorder %s18, 1
    %p99 = por %p97, %p98
    %p100 = scmp.ne.s32.totalorder %s91, %s92
    %p101 = scmp.eq.s32.totalorder %s18, 0
    %p102 = por %p100, %p101
    %p103 = scmp.ne.s32.totalorder %s91, %s92
    %p104 = scmp.eq.s32.totalorder %s19, 1
    %p105 = por %p103, %p104
    %p107 = scmp.ne.s32.totalorder %s92, %s106
    %p108 = scmp.eq.s32.totalorder %s19, 0
    %p109 = por %p107, %p108
    %s111 = sadd.s32 %s110, 1
    %p114 = scmp.eq.s32.totalorder %s13, 1
    %p115 = scmp.ne.s32.totalorder %s110, %s112
    %p116 = scmp.eq.s32.totalorder %s13, 0
    %p117 = por %p115, %p116
    %p118 = scmp.ne.s32.totalorder %s110, %s112
    %p119 = scmp.eq.s32.totalorder %s18, 1
    %p120 = por %p118, %p119
    %p121 = scmp.ne.s32.totalorder %s112, %s113
    %p122 = scmp.eq.s32.totalorder %s18, 0
    %p123 = por %p121, %p122
    %p124 = scmp.ne.s32.totalorder %s112, %s113
    %p125 = scmp.eq.s32.totalorder %s19, 1
    %p126 = por %p124, %p125
    %p128 = scmp.ne.s32.totalorder %s113, %s127
    %p129 = scmp.eq.s32.totalorder %s19, 0
    %p130 = por %p128, %p129
    %s132 = sadd.s32 %s131, 1
    %p135 = scmp.eq.s32.totalorder %s13, 1
    %p136 = scmp.ne.s32.totalorder %s131, %s133
    %p137 = scmp.eq.s32.totalorder %s13, 0
    %p138 = por %p136, %p137
    %p139 = scmp.ne.s32.totalorder %s131, %s133
    %p140 = scmp.eq.s32.totalorder %s18, 1
    %p141 = por %p139, %p140
    %p142 = scmp.ne.s32.totalorder %s133, %s134
    %p143 = scmp.eq.s32.totalorder %s18, 0
    %p144 = por %p142, %p143
    %p145 = scmp.ne.s32.totalorder %s133, %s134
    %p146 = scmp.eq.s32.totalorder %s19, 1
    %p147 = por %p145, %p146
    %p149 = scmp.ne.s32.totalorder %s134, %s148
    %p150 = scmp.eq.s32.totalorder %s19, 0
    %p151 = por %p149, %p150
    %s153 = sadd.s32 %s152, 1
    %p156 = scmp.eq.s32.totalorder %s13, 1
    %p157 = scmp.ne.s32.totalorder %s152, %s154
    %p158 = scmp.eq.s32.totalorder %s13, 0
    %p159 = por %p157, %p158
    %p160 = scmp.ne.s32.totalorder %s152, %s154
    %p161 = scmp.eq.s32.totalorder %s18, 1
    %p162 = por %p160, %p161
    %p163 = scmp.ne.s32.totalorder %s154, %s155
    %p164 = scmp.eq.s32.totalorder %s18, 0
    %p165 = por %p163, %p164
    %p166 = scmp.ne.s32.totalorder %s154, %s155
    %p167 = scmp.eq.s32.totalorder %s19, 1
    %p168 = por %p166, %p167
    %p170 = scmp.ne.s32.totalorder %s155, %s169
    %p171 = scmp.eq.s32.totalorder %s19, 0
    %p172 = por %p170, %p171
    %s173 = ssub.s32 %s13, %s20
    %p174 = scmp.eq.s32.totalorder %s173, 0
    %s176 = sadd.s32 %s175, 1
    %s177 = scalar_select %p174, %s175, %s176
    %p180 = pneg %p174
    %p181 = scmp.eq.s32.totalorder %s13, 1
    %p182 = por %p180, %p181
    %p183 = scmp.ne.s32.totalorder %s175, %s178
    %p184 = scmp.eq.s32.totalorder %s13, 0
    %p185 = por %p183, %p184
    %p186 = scmp.ne.s32.totalorder %s175, %s178
    %p187 = scmp.eq.s32.totalorder %s18, 1
    %p188 = por %p186, %p187
    %p189 = scmp.ne.s32.totalorder %s178, %s179
    %p190 = scmp.eq.s32.totalorder %s18, 0
    %p191 = por %p189, %p190
    %p192 = scmp.ne.s32.totalorder %s178, %s179
    %p193 = scmp.eq.s32.totalorder %s19, 1
    %p194 = por %p192, %p193
    %p196 = scmp.ne.s32.totalorder %s179, %s195
    %p197 = scmp.eq.s32.totalorder %s19, 0
    %p198 = por %p196, %p197
    %p199 = scmp.le.s32.totalorder 1, %s13
    %p200 = scmp.lt.s32.totalorder %s13, 3
    %p201 = pnand %p199, %p200
    %p202 = pneg %p201
    // Predicated region
    $region9: #{gsc2d_forward.1} parent=5 // pred_check
      _
    $region10: #{gsc2d_forward.1} parent=5 // pred_check_branch
      %204 = sbr.rel (%p201) target = $region12
    $region11: #{gsc2d_forward.1} parent=5 // pred_region
      %s205 = ssub.s32 %s13, 1
      // Predicated region
      $region13: #{gsc2d_forward.1} parent=11 // pred_check
        %p206 = pneg %p60
      $region14: #{gsc2d_forward.1} parent=11 // pred_check_branch
        %208 = sbr.rel (%p206) target = $region16
      $region15: #{gsc2d_forward.1} parent=11 // pred_region
        _
      $region16: #{gsc2d_forward.1} parent=11 // pred_fallthru
        _
      // Predicated region
      $region17: #{gsc2d_forward.1} parent=11 // pred_check
        %p209 = pneg %p81
      $region18: #{gsc2d_forward.1} parent=11 // pred_check_branch
        %211 = sbr.rel (%p209) target = $region20
      $region19: #{gsc2d_forward.1} parent=11 // pred_region
        _
      $region20: #{gsc2d_forward.1} parent=11 // pred_fallthru
        _
      // Predicated region
      $region21: #{gsc2d_forward.1} parent=11 // pred_check
        %p212 = pneg %p102
      $region22: #{gsc2d_forward.1} parent=11 // pred_check_branch
        %214 = sbr.rel (%p212) target = $region24
      $region23: #{gsc2d_forward.1} parent=11 // pred_region
        _
      $region24: #{gsc2d_forward.1} parent=11 // pred_fallthru
        _
      // Predicated region
      $region25: #{gsc2d_forward.1} parent=11 // pred_check
        %p215 = pneg %p123
      $region26: #{gsc2d_forward.1} parent=11 // pred_check_branch
        %217 = sbr.rel (%p215) target = $region28
      $region27: #{gsc2d_forward.1} parent=11 // pred_region
        _
      $region28: #{gsc2d_forward.1} parent=11 // pred_fallthru
        _
      // Predicated region
      $region29: #{gsc2d_forward.1} parent=11 // pred_check
        %p218 = pneg %p144
      $region30: #{gsc2d_forward.1} parent=11 // pred_check_branch
        %220 = sbr.rel (%p218) target = $region32
      $region31: #{gsc2d_forward.1} parent=11 // pred_region
        _
      $region32: #{gsc2d_forward.1} parent=11 // pred_fallthru
        _
      // Predicated region
      $region33: #{gsc2d_forward.1} parent=11 // pred_check
        %p221 = pneg %p165
      $region34: #{gsc2d_forward.1} parent=11 // pred_check_branch
        %223 = sbr.rel (%p221) target = $region36
      $region35: #{gsc2d_forward.1} parent=11 // pred_region
        _
      $region36: #{gsc2d_forward.1} parent=11 // pred_fallthru
        _
    $region12: #{gsc2d_forward.1} parent=5 // pred_fallthru
      _
    %p224 = scmp.lt.s32.totalorder %s13, 2
    // Predicated region
    $region37: #{gsc2d_forward.1} parent=5 // pred_check
      %p225 = pneg %p224
    $region38: #{gsc2d_forward.1} parent=5 // pred_check_branch
      %227 = sbr.rel (%p225) target = $region40
    $region39: #{gsc2d_forward.1} parent=5 // pred_region
      // Predicated region
      $region41: #{gsc2d_forward.1} parent=39 // pred_check
        %p228 = pneg %p33
      $region42: #{gsc2d_forward.1} parent=39 // pred_check_branch
        %230 = sbr.rel (%p228) target = $region44
      $region43: #{gsc2d_forward.1} parent=39 // pred_region
        %p231 = scmp.lt.s32.totalorder %s13, 1
        %s232 = scalar_select %p231, %s13, 1
        %s233 = smul.addr %s232, 2
        %s234 = smul.addr %s233, 4
        %s235 = scalar_lea.vmem %s0, %s234
      $region44: #{gsc2d_forward.1} parent=39 // pred_fallthru
        _
    $region40: #{gsc2d_forward.1} parent=5 // pred_fallthru
      _
    %p236 = scmp.le.s32.totalorder 1, %s13
    %p237 = scmp.lt.s32.totalorder %s13, 3
    %p238 = pnand %p236, %p237
    %p239 = pneg %p238
    // Predicated region
    $region45: #{gsc2d_forward.1} parent=5 // pred_check
      _
    $region46: #{gsc2d_forward.1} parent=5 // pred_check_branch
      %241 = sbr.rel (%p238) target = $region48
    $region47: #{gsc2d_forward.1} parent=5 // pred_region
      %s242 = ssub.s32 %s13, 1
      %p243 = scmp.lt.s32.totalorder %s18, 1
      %s244 = scalar_select %p243, %s18, 1
      %s245 = smul.addr %s244, 2
      %s246 = smul.addr %s245, 4
      %s247 = scalar_lea.vmem %s0, %s246
      %p248 = pneg %p39
      %p249 = pneg %p36
      %p250 = pneg %p60
      %p251 = pneg %p57
      %p252 = pneg %p81
      %p253 = pneg %p78
      %p254 = pneg %p102
      %p255 = pneg %p99
      %p256 = pneg %p123
      %p257 = pneg %p120
      %p258 = pneg %p144
      %p259 = pneg %p141
      %p260 = pneg %p165
      %p261 = pneg %p162
      %p262 = pneg %p191
      %p263 = pneg %p188
      %p264 = scmp.lt.s32.totalorder %s18, 1
      %s265 = scalar_select %p264, %s18, 1
      %s266 = smul.addr %s265, 2
      %s267 = smul.addr %s266, 4
      %s268 = scalar_lea.vmem %s7, %s267
      %p269 = scmp.lt.s32.totalorder %s18, 1
      %s270 = scalar_select %p269, %s18, 1
      %s271 = smul.addr %s270, 2
      %s272 = smul.addr %s271, 4
      %s273 = scalar_lea.vmem %s0, %s272
      %p274 = scmp.lt.s32.totalorder %s18, 1
      %s275 = scalar_select %p274, %s18, 1
      %s276 = smul.addr %s275, 2
      %s277 = smul.addr %s276, 4
      %s278 = scalar_lea.vmem %s7, %s277
      %v279 = vld [vmem:[%s273] sm:$0xff]
      %v280 = vld [vmem:[%s6] sm:$0xf]
      %s281 = scalar_lea.vmem %s2, 16
      %v282 = vld [vmem:[%s281] sm:$0xf]
      %v284 = vcombine.high %v279, %v279
      %286 = vrot.lane.b32.xlu0 %v279, 17
      %v287 = vpop.permute.xlu0 %286
      %288 = vrot.lane.b32.xlu0 %v284, 17
      %v289 = vpop.permute.xlu0 %288
      %v290 = vlaneseq
      %v291 = vand.u32 %v290, 127
      %vm292 = vcmp.lt.s32.totalorder %v291, 17
      %v293 = vsel %vm292, %v287, %v289
      %v294 = vsel %vm292, %v289, %v287
      %v295 = vld [vmem:[%s1] sm:$0x3]
      %v297 = vlaneseq
      %v298 = vshrl.u32 %v297, 7
      %v299 = vsub.s32 0, %v298
      %v300 = vrot.slane %v295, %v299
      %v301 = vlaneseq
      %v302 = vshrl.u32 %v301, 7
      %v303 = vsub.s32 1, %v302
      %v304 = vrot.slane %v295, %v303
      %v307 = vmul.f32 %v294, %v300
      %v308 = vmul.f32 %v293, %v304
      %v309 = vld [vmem:[%s2] sm:$0xf]
      %vm310 = vcmask 31744
      %v312 = vsel %vm310, %v309, 0
      %vm314 = vcmask 1043456
      %v316 = vsel %vm314, %v307, 0
      %v319 = vsel %vm314, %v308, 0
      %321 = vmatprep.subr.mxu0 %v319
      %322 = vmatpush1.msra.mxu0 %v316
      %323 = vmatprep.subr.mxu0 0.0
      %324 = vmatpush1.msra.mxu0 0.0
      %325 = vmatprep.subr.mxu0 0.0
      %326 = vmatpush1.msra.mxu0 0.0
      %327 = vmatprep.subr.mxu0 0.0
      %328 = vmatpush1.msra.mxu0 0.0
      %329 = vmatprep.subr.mxu0 0.0
      %330 = vmatpush1.msra.mxu0 0.0
      %331 = vmatprep.subr.mxu0 0.0
      %332 = vmatpush1.msra.mxu0 0.0
      %333 = vmatprep.subr.mxu0 0.0
      %334 = vmatpush1.msra.mxu0 0.0
      %335 = vmatprep.subr.mxu0 0.0
      %336 = vmatpush1.msra.mxu0 0.0
      %337 = vmatprep.subr.mxu0 0.0
      %338 = vmatpush1.msra.mxu0 0.0
      %339 = vmatprep.subr.mxu0 0.0
      %340 = vmatpush1.msra.mxu0 0.0
      %341 = vmatprep.subr.mxu0 0.0
      %342 = vmatpush1.msra.mxu0 0.0
      %343 = vmatprep.subr.mxu0 0.0
      %344 = vmatpush1.msra.mxu0 0.0
      %345 = vmatprep.subr.mxu0 0.0
      %346 = vmatpush1.msra.mxu0 0.0
      %347 = vmatprep.subr.mxu0 0.0
      %348 = vmatpush1.msra.mxu0 0.0
      %349 = vmatprep.subr.mxu0 0.0
      %350 = vmatpush1.msra.mxu0 0.0
      %351 = vmatprep.subr.mxu0 0.0
      %352 = vmatpush1.msra.mxu0 0.0
      %353 = vmatprep.subr.mxu0 0.0
      %354 = vmatpush1.msra.mxu0 0.0
      %355 = vmatprep.subr.mxu0 0.0
      %356 = vmatpush1.msra.mxu0 0.0
      %357 = vmatprep.subr.mxu0 0.0
      %358 = vmatpush1.msra.mxu0 0.0
      %359 = vmatprep.subr.mxu0 0.0
      %360 = vmatpush1.msra.mxu0 0.0
      %361 = vmatprep.subr.mxu0 0.0
      %362 = vmatpush1.msra.mxu0 0.0
      %363 = vmatprep.subr.mxu0 0.0
      %364 = vmatpush1.msra.mxu0 0.0
      %365 = vmatprep.subr.mxu0 0.0
      %366 = vmatpush1.msra.mxu0 0.0
      %367 = vmatprep.subr.mxu0 0.0
      %368 = vmatpush1.msra.mxu0 0.0
      %369 = vmatprep.subr.mxu0 0.0
      %370 = vmatpush1.msra.mxu0 0.0
      %371 = vmatprep.subr.mxu0 0.0
      %372 = vmatpush1.msra.mxu0 0.0
      %373 = vmatprep.subr.mxu0 0.0
      %374 = vmatpush1.msra.mxu0 0.0
      %375 = vmatprep.subr.mxu0 0.0
      %376 = vmatpush1.msra.mxu0 0.0
      %377 = vmatprep.subr.mxu0 0.0
      %378 = vmatpush1.msra.mxu0 0.0
      %379 = vmatprep.subr.mxu0 0.0
      %380 = vmatpush1.msra.mxu0 0.0
      %381 = vmatprep.subr.mxu0 0.0
      %382 = vmatpush1.msra.mxu0 0.0
      %383 = vmatprep.subr.mxu0 0.0
      %384 = vmatpush1.msra.mxu0 0.0
      %385 = vmatprep.mubr.f32.mxu0 0.0
      %386 = vmatmul.mubr.f32.gmra.mrb[0].mxu0 %v312
      %v387 = vpop.f32.mrb[0].mxu0
      %v388 = vadd.f32 0.0, %v387
      %v389 = vpop.f32.mrb[0].mxu0
      %v390 = vadd.f32 0.0, %v389
      %391 = vdwg.mxu0
      %v393 = vsel %vm310, %v282, 0
      %v395 = vsel %vm314, %v279, 0
      %v397 = vsel %vm314, %v284, 0
      %399 = vmatprep.subr.mxu0 %v397
      %400 = vmatpush1.msra.mxu0 %v395
      %401 = vmatprep.subr.mxu0 0.0
      %402 = vmatpush1.msra.mxu0 0.0
      %403 = vmatprep.subr.mxu0 0.0
      %404 = vmatpush1.msra.mxu0 0.0
      %405 = vmatprep.subr.mxu0 0.0
      %406 = vmatpush1.msra.mxu0 0.0
      %407 = vmatprep.subr.mxu0 0.0
      %408 = vmatpush1.msra.mxu0 0.0
      %409 = vmatprep.subr.mxu0 0.0
      %410 = vmatpush1.msra.mxu0 0.0
      %411 = vmatprep.subr.mxu0 0.0
      %412 = vmatpush1.msra.mxu0 0.0
      %413 = vmatprep.subr.mxu0 0.0
      %414 = vmatpush1.msra.mxu0 0.0
      %415 = vmatprep.subr.mxu0 0.0
      %416 = vmatpush1.msra.mxu0 0.0
      %417 = vmatprep.subr.mxu0 0.0
      %418 = vmatpush1.msra.mxu0 0.0
      %419 = vmatprep.subr.mxu0 0.0
      %420 = vmatpush1.msra.mxu0 0.0
      %421 = vmatprep.subr.mxu0 0.0
      %422 = vmatpush1.msra.mxu0 0.0
      %423 = vmatprep.subr.mxu0 0.0
      %424 = vmatpush1.msra.mxu0 0.0
      %425 = vmatprep.subr.mxu0 0.0
      %426 = vmatpush1.msra.mxu0 0.0
      %427 = vmatprep.subr.mxu0 0.0
      %428 = vmatpush1.msra.mxu0 0.0
      %429 = vmatprep.subr.mxu0 0.0
      %430 = vmatpush1.msra.mxu0 0.0
      %431 = vmatprep.subr.mxu0 0.0
      %432 = vmatpush1.msra.mxu0 0.0
      %433 = vmatprep.subr.mxu0 0.0
      %434 = vmatpush1.msra.mxu0 0.0
      %435 = vmatprep.subr.mxu0 0.0
      %436 = vmatpush1.msra.mxu0 0.0
      %437 = vmatprep.subr.mxu0 0.0
      %438 = vmatpush1.msra.mxu0 0.0
      %439 = vmatprep.subr.mxu0 0.0
      %440 = vmatpush1.msra.mxu0 0.0
      %441 = vmatprep.subr.mxu0 0.0
      %442 = vmatpush1.msra.mxu0 0.0
      %443 = vmatprep.subr.mxu0 0.0
      %444 = vmatpush1.msra.mxu0 0.0
      %445 = vmatprep.subr.mxu0 0.0
      %446 = vmatpush1.msra.mxu0 0.0
      %447 = vmatprep.subr.mxu0 0.0
      %448 = vmatpush1.msra.mxu0 0.0
      %449 = vmatprep.subr.mxu0 0.0
      %450 = vmatpush1.msra.mxu0 0.0
      %451 = vmatprep.subr.mxu0 0.0
      %452 = vmatpush1.msra.mxu0 0.0
      %453 = vmatprep.subr.mxu0 0.0
      %454 = vmatpush1.msra.mxu0 0.0
      %455 = vmatprep.subr.mxu0 0.0
      %456 = vmatpush1.msra.mxu0 0.0
      %457 = vmatprep.subr.mxu0 0.0
      %458 = vmatpush1.msra.mxu0 0.0
      %459 = vmatprep.subr.mxu0 0.0
      %460 = vmatpush1.msra.mxu0 0.0
      %461 = vmatprep.subr.mxu0 0.0
      %462 = vmatpush1.msra.mxu0 0.0
      %463 = vmatprep.mubr.f32.mxu0 0.0
      %464 = vmatmul.mubr.f32.gmra.mrb[0].mxu0 %v393
      %v465 = vpop.f32.mrb[0].mxu0
      %v466 = vadd.f32 %v388, %v465
      %v467 = vpop.f32.mrb[0].mxu0
      %v468 = vadd.f32 %v390, %v467
      %469 = vdwg.mxu0
      %470 = vrot.lane.b32.xlu0 %v279, 16
      %v471 = vpop.permute.xlu0 %470
      %472 = vrot.lane.b32.xlu0 %v284, 16
      %v473 = vpop.permute.xlu0 %472
      %vm474 = vcmp.lt.s32.totalorder %v291, 16
      %v475 = vsel %vm474, %v471, %v473
      %v476 = vsel %vm474, %v473, %v471
      %s477 = scalar_lea.vmem %s1, 2
      %v478 = vld [vmem:[%s477] sm:$0x3]
      %v480 = vlaneseq
      %v481 = vshrl.u32 %v480, 7
      %v482 = vsub.s32 0, %v481
      %v483 = vrot.slane %v478, %v482
      %v484 = vlaneseq
      %v485 = vshrl.u32 %v484, 7
      %v486 = vsub.s32 1, %v485
      %v487 = vrot.slane %v478, %v486
      %v490 = vmul.f32 %v476, %v483
      %v491 = vmul.f32 %v475, %v487
      %s492 = scalar_lea.vmem %s2, 4
      %v493 = vld [vmem:[%s492] sm:$0xf]
      %v495 = vsel %vm310, %v493, 0
      %v498 = vsel %vm314, %v490, 0
      %v501 = vsel %vm314, %v491, 0
      %503 = vmatprep.subr.mxu0 %v501
      %504 = vmatpush1.msra.mxu0 %v498
      %505 = vmatprep.subr.mxu0 0.0
      %506 = vmatpush1.msra.mxu0 0.0
      %507 = vmatprep.subr.mxu0 0.0
      %508 = vmatpush1.msra.mxu0 0.0
      %509 = vmatprep.subr.mxu0 0.0
      %510 = vmatpush1.msra.mxu0 0.0
      %511 = vmatprep.subr.mxu0 0.0
      %512 = vmatpush1.msra.mxu0 0.0
      %513 = vmatprep.subr.mxu0 0.0
      %514 = vmatpush1.msra.mxu0 0.0
      %515 = vmatprep.subr.mxu0 0.0
      %516 = vmatpush1.msra.mxu0 0.0
      %517 = vmatprep.subr.mxu0 0.0
      %518 = vmatpush1.msra.mxu0 0.0
      %519 = vmatprep.subr.mxu0 0.0
      %520 = vmatpush1.msra.mxu0 0.0
      %521 = vmatprep.subr.mxu0 0.0
      %522 = vmatpush1.msra.mxu0 0.0
      %523 = vmatprep.subr.mxu0 0.0
      %524 = vmatpush1.msra.mxu0 0.0
      %525 = vmatprep.subr.mxu0 0.0
      %526 = vmatpush1.msra.mxu0 0.0
      %527 = vmatprep.subr.mxu0 0.0
      %528 = vmatpush1.msra.mxu0 0.0
      %529 = vmatprep.subr.mxu0 0.0
      %530 = vmatpush1.msra.mxu0 0.0
      %531 = vmatprep.subr.mxu0 0.0
      %532 = vmatpush1.msra.mxu0 0.0
      %533 = vmatprep.subr.mxu0 0.0
      %534 = vmatpush1.msra.mxu0 0.0
      %535 = vmatprep.subr.mxu0 0.0
      %536 = vmatpush1.msra.mxu0 0.0
      %537 = vmatprep.subr.mxu0 0.0
      %538 = vmatpush1.msra.mxu0 0.0
      %539 = vmatprep.subr.mxu0 0.0
      %540 = vmatpush1.msra.mxu0 0.0
      %541 = vmatprep.subr.mxu0 0.0
      %542 = vmatpush1.msra.mxu0 0.0
      %543 = vmatprep.subr.mxu0 0.0
      %544 = vmatpush1.msra.mxu0 0.0
      %545 = vmatprep.subr.mxu0 0.0
      %546 = vmatpush1.msra.mxu0 0.0
      %547 = vmatprep.subr.mxu0 0.0
      %548 = vmatpush1.msra.mxu0 0.0
      %549 = vmatprep.subr.mxu0 0.0
      %550 = vmatpush1.msra.mxu0 0.0
      %551 = vmatprep.subr.mxu0 0.0
      %552 = vmatpush1.msra.mxu0 0.0
      %553 = vmatprep.subr.mxu0 0.0
      %554 = vmatpush1.msra.mxu0 0.0
      %555 = vmatprep.subr.mxu0 0.0
      %556 = vmatpush1.msra.mxu0 0.0
      %557 = vmatprep.subr.mxu0 0.0
      %558 = vmatpush1.msra.mxu0 0.0
      %559 = vmatprep.subr.mxu0 0.0
      %560 = vmatpush1.msra.mxu0 0.0
      %561 = vmatprep.subr.mxu0 0.0
      %562 = vmatpush1.msra.mxu0 0.0
      %563 = vmatprep.subr.mxu0 0.0
      %564 = vmatpush1.msra.mxu0 0.0
      %565 = vmatprep.subr.mxu0 0.0
      %566 = vmatpush1.msra.mxu0 0.0
      %567 = vmatprep.mubr.f32.mxu0 0.0
      %568 = vmatmul.mubr.f32.gmra.mrb[0].mxu0 %v495
      %v569 = vpop.f32.mrb[0].mxu0
      %v570 = vadd.f32 0.0, %v569
      %v571 = vpop.f32.mrb[0].mxu0
      %v572 = vadd.f32 0.0, %v571
      %573 = vdwg.mxu0
      %v574 = vadd.f32 %v466, %v570
      %v575 = vadd.f32 %v468, %v572
      %576 = vrot.lane.b32.xlu0 %v279, 15
      %v577 = vpop.permute.xlu0 %576
      %578 = vrot.lane.b32.xlu0 %v284, 15
      %v579 = vpop.permute.xlu0 %578
      %vm580 = vcmp.lt.s32.totalorder %v291, 15
      %v581 = vsel %vm580, %v577, %v579
      %v582 = vsel %vm580, %v579, %v577
      %s583 = scalar_lea.vmem %s1, 4
      %v584 = vld [vmem:[%s583] sm:$0x3]
      %v586 = vlaneseq
      %v587 = vshrl.u32 %v586, 7
      %v588 = vsub.s32 0, %v587
      %v589 = vrot.slane %v584, %v588
      %v590 = vlaneseq
      %v591 = vshrl.u32 %v590, 7
      %v592 = vsub.s32 1, %v591
      %v593 = vrot.slane %v584, %v592
      %v596 = vmul.f32 %v582, %v589
      %v597 = vmul.f32 %v581, %v593
      %s598 = scalar_lea.vmem %s2, 8
      %v599 = vld [vmem:[%s598] sm:$0xf]
      %v601 = vsel %vm310, %v599, 0
      %v604 = vsel %vm314, %v596, 0
      %v607 = vsel %vm314, %v597, 0
      %609 = vmatprep.subr.mxu0 %v607
      %610 = vmatpush1.msra.mxu0 %v604
      %611 = vmatprep.subr.mxu0 0.0
      %612 = vmatpush1.msra.mxu0 0.0
      %613 = vmatprep.subr.mxu0 0.0
      %614 = vmatpush1.msra.mxu0 0.0
      %615 = vmatprep.subr.mxu0 0.0
      %616 = vmatpush1.msra.mxu0 0.0
      %617 = vmatprep.subr.mxu0 0.0
      %618 = vmatpush1.msra.mxu0 0.0
      %619 = vmatprep.subr.mxu0 0.0
      %620 = vmatpush1.msra.mxu0 0.0
      %621 = vmatprep.subr.mxu0 0.0
      %622 = vmatpush1.msra.mxu0 0.0
      %623 = vmatprep.subr.mxu0 0.0
      %624 = vmatpush1.msra.mxu0 0.0
      %625 = vmatprep.subr.mxu0 0.0
      %626 = vmatpush1.msra.mxu0 0.0
      %627 = vmatprep.subr.mxu0 0.0
      %628 = vmatpush1.msra.mxu0 0.0
      %629 = vmatprep.subr.mxu0 0.0
      %630 = vmatpush1.msra.mxu0 0.0
      %631 = vmatprep.subr.mxu0 0.0
      %632 = vmatpush1.msra.mxu0 0.0
      %633 = vmatprep.subr.mxu0 0.0
      %634 = vmatpush1.msra.mxu0 0.0
      %635 = vmatprep.subr.mxu0 0.0
      %636 = vmatpush1.msra.mxu0 0.0
      %637 = vmatprep.subr.mxu0 0.0
      %638 = vmatpush1.msra.mxu0 0.0
      %639 = vmatprep.subr.mxu0 0.0
      %640 = vmatpush1.msra.mxu0 0.0
      %641 = vmatprep.subr.mxu0 0.0
      %642 = vmatpush1.msra.mxu0 0.0
      %643 = vmatprep.subr.mxu0 0.0
      %644 = vmatpush1.msra.mxu0 0.0
      %645 = vmatprep.subr.mxu0 0.0
      %646 = vmatpush1.msra.mxu0 0.0
      %647 = vmatprep.subr.mxu0 0.0
      %648 = vmatpush1.msra.mxu0 0.0
      %649 = vmatprep.subr.mxu0 0.0
      %650 = vmatpush1.msra.mxu0 0.0
      %651 = vmatprep.subr.mxu0 0.0
      %652 = vmatpush1.msra.mxu0 0.0
      %653 = vmatprep.subr.mxu0 0.0
      %654 = vmatpush1.msra.mxu0 0.0
      %655 = vmatprep.subr.mxu0 0.0
      %656 = vmatpush1.msra.mxu0 0.0
      %657 = vmatprep.subr.mxu0 0.0
      %658 = vmatpush1.msra.mxu0 0.0
      %659 = vmatprep.subr.mxu0 0.0
      %660 = vmatpush1.msra.mxu0 0.0
      %661 = vmatprep.subr.mxu0 0.0
      %662 = vmatpush1.msra.mxu0 0.0
      %663 = vmatprep.subr.mxu0 0.0
      %664 = vmatpush1.msra.mxu0 0.0
      %665 = vmatprep.subr.mxu0 0.0
      %666 = vmatpush1.msra.mxu0 0.0
      %667 = vmatprep.subr.mxu0 0.0
      %668 = vmatpush1.msra.mxu0 0.0
      %669 = vmatprep.subr.mxu0 0.0
      %670 = vmatpush1.msra.mxu0 0.0
      %671 = vmatprep.subr.mxu0 0.0
      %672 = vmatpush1.msra.mxu0 0.0
      %673 = vmatprep.mubr.f32.mxu0 0.0
      %674 = vmatmul.mubr.f32.gmra.mrb[0].mxu0 %v601
      %v675 = vpop.f32.mrb[0].mxu0
      %v676 = vadd.f32 0.0, %v675
      %v677 = vpop.f32.mrb[0].mxu0
      %v678 = vadd.f32 0.0, %v677
      %679 = vdwg.mxu0
      %v680 = vadd.f32 %v574, %v676
      %v681 = vadd.f32 %v575, %v678
      %682 = vrot.lane.b32.xlu0 %v279, 1
      %v683 = vpop.permute.xlu0 %682
      %684 = vrot.lane.b32.xlu0 %v284, 1
      %v685 = vpop.permute.xlu0 %684
      %vm686 = vcmp.lt.s32.totalorder %v291, 1
      %v687 = vsel %vm686, %v683, %v685
      %v688 = vsel %vm686, %v685, %v683
      %s689 = scalar_lea.vmem %s1, 6
      %v690 = vld [vmem:[%s689] sm:$0x3]
      %v692 = vlaneseq
      %v693 = vshrl.u32 %v692, 7
      %v694 = vsub.s32 0, %v693
      %v695 = vrot.slane %v690, %v694
      %v696 = vlaneseq
      %v697 = vshrl.u32 %v696, 7
      %v698 = vsub.s32 1, %v697
      %v699 = vrot.slane %v690, %v698
      %v702 = vmul.f32 %v688, %v695
      %v703 = vmul.f32 %v687, %v699
      %s704 = scalar_lea.vmem %s2, 12
      %v705 = vld [vmem:[%s704] sm:$0xf]
      %v707 = vsel %vm310, %v705, 0
      %v710 = vsel %vm314, %v702, 0
      %v713 = vsel %vm314, %v703, 0
      %715 = vmatprep.subr.mxu0 %v713
      %716 = vmatpush1.msra.mxu0 %v710
      %717 = vmatprep.subr.mxu0 0.0
      %718 = vmatpush1.msra.mxu0 0.0
      %719 = vmatprep.subr.mxu0 0.0
      %720 = vmatpush1.msra.mxu0 0.0
      %721 = vmatprep.subr.mxu0 0.0
      %722 = vmatpush1.msra.mxu0 0.0
      %723 = vmatprep.subr.mxu0 0.0
      %724 = vmatpush1.msra.mxu0 0.0
      %725 = vmatprep.subr.mxu0 0.0
      %726 = vmatpush1.msra.mxu0 0.0
      %727 = vmatprep.subr.mxu0 0.0
      %728 = vmatpush1.msra.mxu0 0.0
      %729 = vmatprep.subr.mxu0 0.0
      %730 = vmatpush1.msra.mxu0 0.0
      %731 = vmatprep.subr.mxu0 0.0
      %732 = vmatpush1.msra.mxu0 0.0
      %733 = vmatprep.subr.mxu0 0.0
      %734 = vmatpush1.msra.mxu0 0.0
      %735 = vmatprep.subr.mxu0 0.0
      %736 = vmatpush1.msra.mxu0 0.0
      %737 = vmatprep.subr.mxu0 0.0
      %738 = vmatpush1.msra.mxu0 0.0
      %739 = vmatprep.subr.mxu0 0.0
      %740 = vmatpush1.msra.mxu0 0.0
      %741 = vmatprep.subr.mxu0 0.0
      %742 = vmatpush1.msra.mxu0 0.0
      %743 = vmatprep.subr.mxu0 0.0
      %744 = vmatpush1.msra.mxu0 0.0
      %745 = vmatprep.subr.mxu0 0.0
      %746 = vmatpush1.msra.mxu0 0.0
      %747 = vmatprep.subr.mxu0 0.0
      %748 = vmatpush1.msra.mxu0 0.0
      %749 = vmatprep.subr.mxu0 0.0
      %750 = vmatpush1.msra.mxu0 0.0
      %751 = vmatprep.subr.mxu0 0.0
      %752 = vmatpush1.msra.mxu0 0.0
      %753 = vmatprep.subr.mxu0 0.0
      %754 = vmatpush1.msra.mxu0 0.0
      %755 = vmatprep.subr.mxu0 0.0
      %756 = vmatpush1.msra.mxu0 0.0
      %757 = vmatprep.subr.mxu0 0.0
      %758 = vmatpush1.msra.mxu0 0.0
      %759 = vmatprep.subr.mxu0 0.0
      %760 = vmatpush1.msra.mxu0 0.0
      %761 = vmatprep.subr.mxu0 0.0
      %762 = vmatpush1.msra.mxu0 0.0
      %763 = vmatprep.subr.mxu0 0.0
      %764 = vmatpush1.msra.mxu0 0.0
      %765 = vmatprep.subr.mxu0 0.0
      %766 = vmatpush1.msra.mxu0 0.0
      %767 = vmatprep.subr.mxu0 0.0
      %768 = vmatpush1.msra.mxu0 0.0
      %769 = vmatprep.subr.mxu0 0.0
      %770 = vmatpush1.msra.mxu0 0.0
      %771 = vmatprep.subr.mxu0 0.0
      %772 = vmatpush1.msra.mxu0 0.0
      %773 = vmatprep.subr.mxu0 0.0
      %774 = vmatpush1.msra.mxu0 0.0
      %775 = vmatprep.subr.mxu0 0.0
      %776 = vmatpush1.msra.mxu0 0.0
      %777 = vmatprep.subr.mxu0 0.0
      %778 = vmatpush1.msra.mxu0 0.0
      %779 = vmatprep.mubr.f32.mxu0 0.0
      %780 = vmatmul.mubr.f32.gmra.mrb[0].mxu0 %v707
      %v781 = vpop.f32.mrb[0].mxu0
      %v782 = vadd.f32 0.0, %v781
      %v783 = vpop.f32.mrb[0].mxu0
      %v784 = vadd.f32 0.0, %v783
      %785 = vdwg.mxu0
      %v786 = vadd.f32 %v680, %v782
      %v787 = vadd.f32 %v681, %v784
      %788 = vrot.lane.b32.xlu0 %v279, 127
      %v789 = vpop.permute.xlu0 %788
      %790 = vrot.lane.b32.xlu0 %v284, 127
      %v791 = vpop.permute.xlu0 %790
      %vm792 = vcmp.lt.s32.totalorder %v291, 127
      %v793 = vsel %vm792, %v789, %v791
      %v794 = vsel %vm792, %v791, %v789
      %s795 = scalar_lea.vmem %s1, 10
      %v796 = vld [vmem:[%s795] sm:$0x3]
      %v798 = vlaneseq
      %v799 = vshrl.u32 %v798, 7
      %v800 = vsub.s32 0, %v799
      %v801 = vrot.slane %v796, %v800
      %v802 = vlaneseq
      %v803 = vshrl.u32 %v802, 7
      %v804 = vsub.s32 1, %v803
      %v805 = vrot.slane %v796, %v804
      %v808 = vmul.f32 %v793, %v801
      %v809 = vmul.f32 %v794, %v805
      %s810 = scalar_lea.vmem %s2, 20
      %v811 = vld [vmem:[%s810] sm:$0xf]
      %v813 = vsel %vm310, %v811, 0
      %v816 = vsel %vm314, %v808, 0
      %v819 = vsel %vm314, %v809, 0
      %821 = vmatprep.subr.mxu0 %v819
      %822 = vmatpush1.msra.mxu0 %v816
      %823 = vmatprep.subr.mxu0 0.0
      %824 = vmatpush1.msra.mxu0 0.0
      %825 = vmatprep.subr.mxu0 0.0
      %826 = vmatpush1.msra.mxu0 0.0
      %827 = vmatprep.subr.mxu0 0.0
      %828 = vmatpush1.msra.mxu0 0.0
      %829 = vmatprep.subr.mxu0 0.0
      %830 = vmatpush1.msra.mxu0 0.0
      %831 = vmatprep.subr.mxu0 0.0
      %832 = vmatpush1.msra.mxu0 0.0
      %833 = vmatprep.subr.mxu0 0.0
      %834 = vmatpush1.msra.mxu0 0.0
      %835 = vmatprep.subr.mxu0 0.0
      %836 = vmatpush1.msra.mxu0 0.0
      %837 = vmatprep.subr.mxu0 0.0
      %838 = vmatpush1.msra.mxu0 0.0
      %839 = vmatprep.subr.mxu0 0.0
      %840 = vmatpush1.msra.mxu0 0.0
      %841 = vmatprep.subr.mxu0 0.0
      %842 = vmatpush1.msra.mxu0 0.0
      %843 = vmatprep.subr.mxu0 0.0
      %844 = vmatpush1.msra.mxu0 0.0
      %845 = vmatprep.subr.mxu0 0.0
      %846 = vmatpush1.msra.mxu0 0.0
      %847 = vmatprep.subr.mxu0 0.0
      %848 = vmatpush1.msra.mxu0 0.0
      %849 = vmatprep.subr.mxu0 0.0
      %850 = vmatpush1.msra.mxu0 0.0
      %851 = vmatprep.subr.mxu0 0.0
      %852 = vmatpush1.msra.mxu0 0.0
      %853 = vmatprep.subr.mxu0 0.0
      %854 = vmatpush1.msra.mxu0 0.0
      %855 = vmatprep.subr.mxu0 0.0
      %856 = vmatpush1.msra.mxu0 0.0
      %857 = vmatprep.subr.mxu0 0.0
      %858 = vmatpush1.msra.mxu0 0.0
      %859 = vmatprep.subr.mxu0 0.0
      %860 = vmatpush1.msra.mxu0 0.0
      %861 = vmatprep.subr.mxu0 0.0
      %862 = vmatpush1.msra.mxu0 0.0
      %863 = vmatprep.subr.mxu0 0.0
      %864 = vmatpush1.msra.mxu0 0.0
      %865 = vmatprep.subr.mxu0 0.0
      %866 = vmatpush1.msra.mxu0 0.0
      %867 = vmatprep.subr.mxu0 0.0
      %868 = vmatpush1.msra.mxu0 0.0
      %869 = vmatprep.subr.mxu0 0.0
      %870 = vmatpush1.msra.mxu0 0.0
      %871 = vmatprep.subr.mxu0 0.0
      %872 = vmatpush1.msra.mxu0 0.0
      %873 = vmatprep.subr.mxu0 0.0
      %874 = vmatpush1.msra.mxu0 0.0
      %875 = vmatprep.subr.mxu0 0.0
      %876 = vmatpush1.msra.mxu0 0.0
      %877 = vmatprep.subr.mxu0 0.0
      %878 = vmatpush1.msra.mxu0 0.0
      %879 = vmatprep.subr.mxu0 0.0
      %880 = vmatpush1.msra.mxu0 0.0
      %881 = vmatprep.subr.mxu0 0.0
      %882 = vmatpush1.msra.mxu0 0.0
      %883 = vmatprep.subr.mxu0 0.0
      %884 = vmatpush1.msra.mxu0 0.0
      %885 = vmatprep.mubr.f32.mxu0 0.0
      %886 = vmatmul.mubr.f32.gmra.mrb[0].mxu0 %v813
      %v887 = vpop.f32.mrb[0].mxu0
      %v888 = vadd.f32 0.0, %v887
      %v889 = vpop.f32.mrb[0].mxu0
      %v890 = vadd.f32 0.0, %v889
      %891 = vdwg.mxu0
      %v892 = vadd.f32 %v786, %v888
      %v893 = vadd.f32 %v787, %v890
      %894 = vrot.lane.b32.xlu0 %v279, 113
      %v895 = vpop.permute.xlu0 %894
      %896 = vrot.lane.b32.xlu0 %v284, 113
      %v897 = vpop.permute.xlu0 %896
      %vm898 = vcmp.lt.s32.totalorder %v291, 113
      %v899 = vsel %vm898, %v895, %v897
      %v900 = vsel %vm898, %v897, %v895
      %s901 = scalar_lea.vmem %s1, 12
      %v902 = vld [vmem:[%s901] sm:$0x3]
      %v904 = vlaneseq
      %v905 = vshrl.u32 %v904, 7
      %v906 = vsub.s32 0, %v905
      %v907 = vrot.slane %v902, %v906
      %v908 = vlaneseq
      %v909 = vshrl.u32 %v908, 7
      %v910 = vsub.s32 1, %v909
      %v911 = vrot.slane %v902, %v910
      %v914 = vmul.f32 %v899, %v907
      %v915 = vmul.f32 %v900, %v911
      %s916 = scalar_lea.vmem %s2, 24
      %v917 = vld [vmem:[%s916] sm:$0xf]
      %v919 = vsel %vm310, %v917, 0
      %v922 = vsel %vm314, %v914, 0
      %v925 = vsel %vm314, %v915, 0
      %927 = vmatprep.subr.mxu0 %v925
      %928 = vmatpush1.msra.mxu0 %v922
      %929 = vmatprep.subr.mxu0 0.0
      %930 = vmatpush1.msra.mxu0 0.0
      %931 = vmatprep.subr.mxu0 0.0
      %932 = vmatpush1.msra.mxu0 0.0
      %933 = vmatprep.subr.mxu0 0.0
      %934 = vmatpush1.msra.mxu0 0.0
      %935 = vmatprep.subr.mxu0 0.0
      %936 = vmatpush1.msra.mxu0 0.0
      %937 = vmatprep.subr.mxu0 0.0
      %938 = vmatpush1.msra.mxu0 0.0
      %939 = vmatprep.subr.mxu0 0.0
      %940 = vmatpush1.msra.mxu0 0.0
      %941 = vmatprep.subr.mxu0 0.0
      %942 = vmatpush1.msra.mxu0 0.0
      %943 = vmatprep.subr.mxu0 0.0
      %944 = vmatpush1.msra.mxu0 0.0
      %945 = vmatprep.subr.mxu0 0.0
      %946 = vmatpush1.msra.mxu0 0.0
      %947 = vmatprep.subr.mxu0 0.0
      %948 = vmatpush1.msra.mxu0 0.0
      %949 = vmatprep.subr.mxu0 0.0
      %950 = vmatpush1.msra.mxu0 0.0
      %951 = vmatprep.subr.mxu0 0.0
      %952 = vmatpush1.msra.mxu0 0.0
      %953 = vmatprep.subr.mxu0 0.0
      %954 = vmatpush1.msra.mxu0 0.0
      %955 = vmatprep.subr.mxu0 0.0
      %956 = vmatpush1.msra.mxu0 0.0
      %957 = vmatprep.subr.mxu0 0.0
      %958 = vmatpush1.msra.mxu0 0.0
      %959 = vmatprep.subr.mxu0 0.0
      %960 = vmatpush1.msra.mxu0 0.0
      %961 = vmatprep.subr.mxu0 0.0
      %962 = vmatpush1.msra.mxu0 0.0
      %963 = vmatprep.subr.mxu0 0.0
      %964 = vmatpush1.msra.mxu0 0.0
      %965 = vmatprep.subr.mxu0 0.0
      %966 = vmatpush1.msra.mxu0 0.0
      %967 = vmatprep.subr.mxu0 0.0
      %968 = vmatpush1.msra.mxu0 0.0
      %969 = vmatprep.subr.mxu0 0.0
      %970 = vmatpush1.msra.mxu0 0.0
      %971 = vmatprep.subr.mxu0 0.0
      %972 = vmatpush1.msra.mxu0 0.0
      %973 = vmatprep.subr.mxu0 0.0
      %974 = vmatpush1.msra.mxu0 0.0
      %975 = vmatprep.subr.mxu0 0.0
      %976 = vmatpush1.msra.mxu0 0.0
      %977 = vmatprep.subr.mxu0 0.0
      %978 = vmatpush1.msra.mxu0 0.0
      %979 = vmatprep.subr.mxu0 0.0
      %980 = vmatpush1.msra.mxu0 0.0
      %981 = vmatprep.subr.mxu0 0.0
      %982 = vmatpush1.msra.mxu0 0.0
      %983 = vmatprep.subr.mxu0 0.0
      %984 = vmatpush1.msra.mxu0 0.0
      %985 = vmatprep.subr.mxu0 0.0
      %986 = vmatpush1.msra.mxu0 0.0
      %987 = vmatprep.subr.mxu0 0.0
      %988 = vmatpush1.msra.mxu0 0.0
      %989 = vmatprep.subr.mxu0 0.0
      %990 = vmatpush1.msra.mxu0 0.0
      %991 = vmatprep.mubr.f32.mxu0 0.0
      %992 = vmatmul.mubr.f32.gmra.mrb[0].mxu0 %v919
      %v993 = vpop.f32.mrb[0].mxu0
      %v994 = vadd.f32 0.0, %v993
      %v995 = vpop.f32.mrb[0].mxu0
      %v996 = vadd.f32 0.0, %v995
      %997 = vdwg.mxu0
      %v998 = vadd.f32 %v892, %v994
      %v999 = vadd.f32 %v893, %v996
      %1000 = vrot.lane.b32.xlu0 %v279, 112
      %v1001 = vpop.permute.xlu0 %1000
      %1002 = vrot.lane.b32.xlu0 %v284, 112
      %v1003 = vpop.permute.xlu0 %1002
      %vm1004 = vcmp.lt.s32.totalorder %v291, 112
      %v1005 = vsel %vm1004, %v1001, %v1003
      %v1006 = vsel %vm1004, %v1003, %v1001
      %s1007 = scalar_lea.vmem %s1, 14
      %v1008 = vld [vmem:[%s1007] sm:$0x3]
      %v1010 = vlaneseq
      %v1011 = vshrl.u32 %v1010, 7
      %v1012 = vsub.s32 0, %v1011
      %v1013 = vrot.slane %v1008, %v1012
      %v1014 = vlaneseq
      %v1015 = vshrl.u32 %v1014, 7
      %v1016 = vsub.s32 1, %v1015
      %v1017 = vrot.slane %v1008, %v1016
      %v1020 = vmul.f32 %v1005, %v1013
      %v1021 = vmul.f32 %v1006, %v1017
      %s1022 = scalar_lea.vmem %s2, 28
      %v1023 = vld [vmem:[%s1022] sm:$0xf]
      %v1025 = vsel %vm310, %v1023, 0
      %v1028 = vsel %vm314, %v1020, 0
      %v1031 = vsel %vm314, %v1021, 0
      %1033 = vmatprep.subr.mxu0 %v1031
      %1034 = vmatpush1.msra.mxu0 %v1028
      %1035 = vmatprep.subr.mxu0 0.0
      %1036 = vmatpush1.msra.mxu0 0.0
      %1037 = vmatprep.subr.mxu0 0.0
      %1038 = vmatpush1.msra.mxu0 0.0
      %1039 = vmatprep.subr.mxu0 0.0
      %1040 = vmatpush1.msra.mxu0 0.0
      %1041 = vmatprep.subr.mxu0 0.0
      %1042 = vmatpush1.msra.mxu0 0.0
      %1043 = vmatprep.subr.mxu0 0.0
      %1044 = vmatpush1.msra.mxu0 0.0
      %1045 = vmatprep.subr.mxu0 0.0
      %1046 = vmatpush1.msra.mxu0 0.0
      %1047 = vmatprep.subr.mxu0 0.0
      %1048 = vmatpush1.msra.mxu0 0.0
      %1049 = vmatprep.subr.mxu0 0.0
      %1050 = vmatpush1.msra.mxu0 0.0
      %1051 = vmatprep.subr.mxu0 0.0
      %1052 = vmatpush1.msra.mxu0 0.0
      %1053 = vmatprep.subr.mxu0 0.0
      %1054 = vmatpush1.msra.mxu0 0.0
      %1055 = vmatprep.subr.mxu0 0.0
      %1056 = vmatpush1.msra.mxu0 0.0
      %1057 = vmatprep.subr.mxu0 0.0
      %1058 = vmatpush1.msra.mxu0 0.0
      %1059 = vmatprep.subr.mxu0 0.0
      %1060 = vmatpush1.msra.mxu0 0.0
      %1061 = vmatprep.subr.mxu0 0.0
      %1062 = vmatpush1.msra.mxu0 0.0
      %1063 = vmatprep.subr.mxu0 0.0
      %1064 = vmatpush1.msra.mxu0 0.0
      %1065 = vmatprep.subr.mxu0 0.0
      %1066 = vmatpush1.msra.mxu0 0.0
      %1067 = vmatprep.subr.mxu0 0.0
      %1068 = vmatpush1.msra.mxu0 0.0
      %1069 = vmatprep.subr.mxu0 0.0
      %1070 = vmatpush1.msra.mxu0 0.0
      %1071 = vmatprep.subr.mxu0 0.0
      %1072 = vmatpush1.msra.mxu0 0.0
      %1073 = vmatprep.subr.mxu0 0.0
      %1074 = vmatpush1.msra.mxu0 0.0
      %1075 = vmatprep.subr.mxu0 0.0
      %1076 = vmatpush1.msra.mxu0 0.0
      %1077 = vmatprep.subr.mxu0 0.0
      %1078 = vmatpush1.msra.mxu0 0.0
      %1079 = vmatprep.subr.mxu0 0.0
      %1080 = vmatpush1.msra.mxu0 0.0
      %1081 = vmatprep.subr.mxu0 0.0
      %1082 = vmatpush1.msra.mxu0 0.0
      %1083 = vmatprep.subr.mxu0 0.0
      %1084 = vmatpush1.msra.mxu0 0.0
      %1085 = vmatprep.subr.mxu0 0.0
      %1086 = vmatpush1.msra.mxu0 0.0
      %1087 = vmatprep.subr.mxu0 0.0
      %1088 = vmatpush1.msra.mxu0 0.0
      %1089 = vmatprep.subr.mxu0 0.0
      %1090 = vmatpush1.msra.mxu0 0.0
      %1091 = vmatprep.subr.mxu0 0.0
      %1092 = vmatpush1.msra.mxu0 0.0
      %1093 = vmatprep.subr.mxu0 0.0
      %1094 = vmatpush1.msra.mxu0 0.0
      %1095 = vmatprep.subr.mxu0 0.0
      %1096 = vmatpush1.msra.mxu0 0.0
      %1097 = vmatprep.mubr.f32.mxu0 0.0
      %1098 = vmatmul.mubr.f32.gmra.mrb[0].mxu0 %v1025
      %v1099 = vpop.f32.mrb[0].mxu0
      %v1100 = vadd.f32 0.0, %v1099
      %v1101 = vpop.f32.mrb[0].mxu0
      %v1102 = vadd.f32 0.0, %v1101
      %1103 = vdwg.mxu0
      %v1104 = vadd.f32 %v998, %v1100
      %v1105 = vadd.f32 %v999, %v1102
      %1106 = vrot.lane.b32.xlu0 %v279, 111
      %v1107 = vpop.permute.xlu0 %1106
      %1108 = vrot.lane.b32.xlu0 %v284, 111
      %v1109 = vpop.permute.xlu0 %1108
      %vm1110 = vcmp.lt.s32.totalorder %v291, 111
      %v1111 = vsel %vm1110, %v1107, %v1109
      %v1112 = vsel %vm1110, %v1109, %v1107
      %s1113 = scalar_lea.vmem %s1, 16
      %v1114 = vld [vmem:[%s1113] sm:$0x3]
      %v1116 = vlaneseq
      %v1117 = vshrl.u32 %v1116, 7
      %v1118 = vsub.s32 0, %v1117
      %v1119 = vrot.slane %v1114, %v1118
      %v1120 = vlaneseq
      %v1121 = vshrl.u32 %v1120, 7
      %v1122 = vsub.s32 1, %v1121
      %v1123 = vrot.slane %v1114, %v1122
      %v1126 = vmul.f32 %v1111, %v1119
      %v1127 = vmul.f32 %v1112, %v1123
      %s1128 = scalar_lea.vmem %s2, 32
      %v1129 = vld [vmem:[%s1128] sm:$0xf]
      %v1131 = vsel %vm310, %v1129, 0
      %v1134 = vsel %vm314, %v1126, 0
      %v1137 = vsel %vm314, %v1127, 0
      %1139 = vmatprep.subr.mxu0 %v1137
      %1140 = vmatpush1.msra.mxu0 %v1134
      %1141 = vmatprep.subr.mxu0 0.0
      %1142 = vmatpush1.msra.mxu0 0.0
      %1143 = vmatprep.subr.mxu0 0.0
      %1144 = vmatpush1.msra.mxu0 0.0
      %1145 = vmatprep.subr.mxu0 0.0
      %1146 = vmatpush1.msra.mxu0 0.0
      %1147 = vmatprep.subr.mxu0 0.0
      %1148 = vmatpush1.msra.mxu0 0.0
      %1149 = vmatprep.subr.mxu0 0.0
      %1150 = vmatpush1.msra.mxu0 0.0
      %1151 = vmatprep.subr.mxu0 0.0
      %1152 = vmatpush1.msra.mxu0 0.0
      %1153 = vmatprep.subr.mxu0 0.0
      %1154 = vmatpush1.msra.mxu0 0.0
      %1155 = vmatprep.subr.mxu0 0.0
      %1156 = vmatpush1.msra.mxu0 0.0
      %1157 = vmatprep.subr.mxu0 0.0
      %1158 = vmatpush1.msra.mxu0 0.0
      %1159 = vmatprep.subr.mxu0 0.0
      %1160 = vmatpush1.msra.mxu0 0.0
      %1161 = vmatprep.subr.mxu0 0.0
      %1162 = vmatpush1.msra.mxu0 0.0
      %1163 = vmatprep.subr.mxu0 0.0
      %1164 = vmatpush1.msra.mxu0 0.0
      %1165 = vmatprep.subr.mxu0 0.0
      %1166 = vmatpush1.msra.mxu0 0.0
      %1167 = vmatprep.subr.mxu0 0.0
      %1168 = vmatpush1.msra.mxu0 0.0
      %1169 = vmatprep.subr.mxu0 0.0
      %1170 = vmatpush1.msra.mxu0 0.0
      %1171 = vmatprep.subr.mxu0 0.0
      %1172 = vmatpush1.msra.mxu0 0.0
      %1173 = vmatprep.subr.mxu0 0.0
      %1174 = vmatpush1.msra.mxu0 0.0
      %1175 = vmatprep.subr.mxu0 0.0
      %1176 = vmatpush1.msra.mxu0 0.0
      %1177 = vmatprep.subr.mxu0 0.0
      %1178 = vmatpush1.msra.mxu0 0.0
      %1179 = vmatprep.subr.mxu0 0.0
      %1180 = vmatpush1.msra.mxu0 0.0
      %1181 = vmatprep.subr.mxu0 0.0
      %1182 = vmatpush1.msra.mxu0 0.0
      %1183 = vmatprep.subr.mxu0 0.0
      %1184 = vmatpush1.msra.mxu0 0.0
      %1185 = vmatprep.subr.mxu0 0.0
      %1186 = vmatpush1.msra.mxu0 0.0
      %1187 = vmatprep.subr.mxu0 0.0
      %1188 = vmatpush1.msra.mxu0 0.0
      %1189 = vmatprep.subr.mxu0 0.0
      %1190 = vmatpush1.msra.mxu0 0.0
      %1191 = vmatprep.subr.mxu0 0.0
      %1192 = vmatpush1.msra.mxu0 0.0
      %1193 = vmatprep.subr.mxu0 0.0
      %1194 = vmatpush1.msra.mxu0 0.0
      %1195 = vmatprep.subr.mxu0 0.0
      %1196 = vmatpush1.msra.mxu0 0.0
      %1197 = vmatprep.subr.mxu0 0.0
      %1198 = vmatpush1.msra.mxu0 0.0
      %1199 = vmatprep.subr.mxu0 0.0
      %1200 = vmatpush1.msra.mxu0 0.0
      %1201 = vmatprep.subr.mxu0 0.0
      %1202 = vmatpush1.msra.mxu0 0.0
      %1203 = vmatprep.mubr.f32.mxu0 0.0
      %1204 = vmatmul.mubr.f32.gmra.mrb[0].mxu0 %v1131
      %v1205 = vpop.f32.mrb[0].mxu0
      %v1206 = vadd.f32 0.0, %v1205
      %v1207 = vpop.f32.mrb[0].mxu0
      %v1208 = vadd.f32 0.0, %v1207
      %1209 = vdwg.mxu0
      %v1210 = vadd.f32 %v1104, %v1206
      %v1211 = vadd.f32 %v1105, %v1208
      %1213 = vset.pattern.permute.xlu0 0
      %1214 = vperm.xlu0 %1213, %v280
      %v1215 = vpop.permute.xlu0 %1214
      %v1217 = vadd.f32 %v1210, %v1215
      %v1218 = vadd.f32 %v1211, %v1215
      %v1219 = vsel %vm314, %v1217, 0.0
      %v1220 = vsel %vm314, %v1218, 0.0
      %v1221 = vadd.f32 %v1219, %v1220
      %1222 = vadd.xlane.f32.xlu0 %v1221
      %v1223 = vpop.xlane.xlu0 %1222
      %v1224 = vmul.f32 %v1217, %v1217
      %v1225 = vmul.f32 %v1218, %v1218
      %v1226 = vsel %vm314, %v1224, 0.0
      %v1227 = vsel %vm314, %v1225, 0.0
      %v1228 = vadd.f32 %v1226, %v1227
      %1229 = vadd.xlane.f32.xlu0 %v1228
      %v1230 = vpop.xlane.xlu0 %1229
      %v1231 = vmul.f32 %v1223, 0.00390625
      %v1232 = vmul.f32 %v1230, 0.00390625
      %v1233 = vmul.f32 %v1231, %v1231
      %v1234 = vsub.f32 %v1232, %v1233
      %v1235 = vadd.f32 %v1234, 1e-05
      %v1236 = vrsqrt.pop %v1235
      %v1237 = vsub.f32 %v1217, %v1231
      %v1238 = vsub.f32 %v1218, %v1231
      %v1239 = vmul.f32 %v1237, %v1236
      %v1240 = vmul.f32 %v1238, %v1236
      %v1241 = vmax.f32 %v1239, 0.0
      %v1242 = vmax.f32 %v1240, 0.0
      %s1243 = scalar_lea.vmem %s6, 4
      %v1244 = vld [vmem:[%s1243] sm:$0xf]
      %s1245 = scalar_lea.vmem %s3, 16
      %v1246 = vld [vmem:[%s1245] sm:$0xf]
      %1247 = vrot.lane.b32.xlu0 %v1241, 17
      %v1248 = vpop.permute.xlu0 %1247
      %1249 = vrot.lane.b32.xlu0 %v1242, 17
      %v1250 = vpop.permute.xlu0 %1249
      %v1251 = vsel %vm292, %v1248, %v1250
      %v1252 = vsel %vm292, %v1250, %v1248
      %v1253 = vmul.f32 %v1252, %v300
      %v1254 = vmul.f32 %v1251, %v304
      %v1255 = vld [vmem:[%s3] sm:$0xf]
      %v1257 = vsel %vm310, %v1255, 0
      %v1260 = vsel %vm314, %v1253, 0
      %v1263 = vsel %vm314, %v1254, 0
      %1265 = vmatprep.subr.mxu0 %v1263
      %1266 = vmatpush1.msra.mxu0 %v1260
      %1267 = vmatprep.subr.mxu0 0.0
      %1268 = vmatpush1.msra.mxu0 0.0
      %1269 = vmatprep.subr.mxu0 0.0
      %1270 = vmatpush1.msra.mxu0 0.0
      %1271 = vmatprep.subr.mxu0 0.0
      %1272 = vmatpush1.msra.mxu0 0.0
      %1273 = vmatprep.subr.mxu0 0.0
      %1274 = vmatpush1.msra.mxu0 0.0
      %1275 = vmatprep.subr.mxu0 0.0
      %1276 = vmatpush1.msra.mxu0 0.0
      %1277 = vmatprep.subr.mxu0 0.0
      %1278 = vmatpush1.msra.mxu0 0.0
      %1279 = vmatprep.subr.mxu0 0.0
      %1280 = vmatpush1.msra.mxu0 0.0
      %1281 = vmatprep.subr.mxu0 0.0
      %1282 = vmatpush1.msra.mxu0 0.0
      %1283 = vmatprep.subr.mxu0 0.0
      %1284 = vmatpush1.msra.mxu0 0.0
      %1285 = vmatprep.subr.mxu0 0.0
      %1286 = vmatpush1.msra.mxu0 0.0
      %1287 = vmatprep.subr.mxu0 0.0
      %1288 = vmatpush1.msra.mxu0 0.0
      %1289 = vmatprep.subr.mxu0 0.0
      %1290 = vmatpush1.msra.mxu0 0.0
      %1291 = vmatprep.subr.mxu0 0.0
      %1292 = vmatpush1.msra.mxu0 0.0
      %1293 = vmatprep.subr.mxu0 0.0
      %1294 = vmatpush1.msra.mxu0 0.0
      %1295 = vmatprep.subr.mxu0 0.0
      %1296 = vmatpush1.msra.mxu0 0.0
      %1297 = vmatprep.subr.mxu0 0.0
      %1298 = vmatpush1.msra.mxu0 0.0
      %1299 = vmatprep.subr.mxu0 0.0
      %1300 = vmatpush1.msra.mxu0 0.0
      %1301 = vmatprep.subr.mxu0 0.0
      %1302 = vmatpush1.msra.mxu0 0.0
      %1303 = vmatprep.subr.mxu0 0.0
      %1304 = vmatpush1.msra.mxu0 0.0
      %1305 = vmatprep.subr.mxu0 0.0
      %1306 = vmatpush1.msra.mxu0 0.0
      %1307 = vmatprep.subr.mxu0 0.0
      %1308 = vmatpush1.msra.mxu0 0.0
      %1309 = vmatprep.subr.mxu0 0.0
      %1310 = vmatpush1.msra.mxu0 0.0
      %1311 = vmatprep.subr.mxu0 0.0
      %1312 = vmatpush1.msra.mxu0 0.0
      %1313 = vmatprep.subr.mxu0 0.0
      %1314 = vmatpush1.msra.mxu0 0.0
      %1315 = vmatprep.subr.mxu0 0.0
      %1316 = vmatpush1.msra.mxu0 0.0
      %1317 = vmatprep.subr.mxu0 0.0
      %1318 = vmatpush1.msra.mxu0 0.0
      %1319 = vmatprep.subr.mxu0 0.0
      %1320 = vmatpush1.msra.mxu0 0.0
      %1321 = vmatprep.subr.mxu0 0.0
      %1322 = vmatpush1.msra.mxu0 0.0
      %1323 = vmatprep.subr.mxu0 0.0
      %1324 = vmatpush1.msra.mxu0 0.0
      %1325 = vmatprep.subr.mxu0 0.0
      %1326 = vmatpush1.msra.mxu0 0.0
      %1327 = vmatprep.subr.mxu0 0.0
      %1328 = vmatpush1.msra.mxu0 0.0
      %1329 = vmatprep.mubr.f32.mxu0 0.0
      %1330 = vmatmul.mubr.f32.gmra.mrb[0].mxu0 %v1257
      %v1331 = vpop.f32.mrb[0].mxu0
      %v1332 = vadd.f32 0.0, %v1331
      %v1333 = vpop.f32.mrb[0].mxu0
      %v1334 = vadd.f32 0.0, %v1333
      %1335 = vdwg.mxu0
      %v1337 = vsel %vm310, %v1246, 0
      %v1340 = vsel %vm314, %v1241, 0
      %v1343 = vsel %vm314, %v1242, 0
      %1345 = vmatprep.subr.mxu0 %v1343
      %1346 = vmatpush1.msra.mxu0 %v1340
      %1347 = vmatprep.subr.mxu0 0.0
      %1348 = vmatpush1.msra.mxu0 0.0
      %1349 = vmatprep.subr.mxu0 0.0
      %1350 = vmatpush1.msra.mxu0 0.0
      %1351 = vmatprep.subr.mxu0 0.0
      %1352 = vmatpush1.msra.mxu0 0.0
      %1353 = vmatprep.subr.mxu0 0.0
      %1354 = vmatpush1.msra.mxu0 0.0
      %1355 = vmatprep.subr.mxu0 0.0
      %1356 = vmatpush1.msra.mxu0 0.0
      %1357 = vmatprep.subr.mxu0 0.0
      %1358 = vmatpush1.msra.mxu0 0.0
      %1359 = vmatprep.subr.mxu0 0.0
      %1360 = vmatpush1.msra.mxu0 0.0
      %1361 = vmatprep.subr.mxu0 0.0
      %1362 = vmatpush1.msra.mxu0 0.0
      %1363 = vmatprep.subr.mxu0 0.0
      %1364 = vmatpush1.msra.mxu0 0.0
      %1365 = vmatprep.subr.mxu0 0.0
      %1366 = vmatpush1.msra.mxu0 0.0
      %1367 = vmatprep.subr.mxu0 0.0
      %1368 = vmatpush1.msra.mxu0 0.0
      %1369 = vmatprep.subr.mxu0 0.0
      %1370 = vmatpush1.msra.mxu0 0.0
      %1371 = vmatprep.subr.mxu0 0.0
      %1372 = vmatpush1.msra.mxu0 0.0
      %1373 = vmatprep.subr.mxu0 0.0
      %1374 = vmatpush1.msra.mxu0 0.0
      %1375 = vmatprep.subr.mxu0 0.0
      %1376 = vmatpush1.msra.mxu0 0.0
      %1377 = vmatprep.subr.mxu0 0.0
      %1378 = vmatpush1.msra.mxu0 0.0
      %1379 = vmatprep.subr.mxu0 0.0
      %1380 = vmatpush1.msra.mxu0 0.0
      %1381 = vmatprep.subr.mxu0 0.0
      %1382 = vmatpush1.msra.mxu0 0.0
      %1383 = vmatprep.subr.mxu0 0.0
      %1384 = vmatpush1.msra.mxu0 0.0
      %1385 = vmatprep.subr.mxu0 0.0
      %1386 = vmatpush1.msra.mxu0 0.0
      %1387 = vmatprep.subr.mxu0 0.0
      %1388 = vmatpush1.msra.mxu0 0.0
      %1389 = vmatprep.subr.mxu0 0.0
      %1390 = vmatpush1.msra.mxu0 0.0
      %1391 = vmatprep.subr.mxu0 0.0
      %1392 = vmatpush1.msra.mxu0 0.0
      %1393 = vmatprep.subr.mxu0 0.0
      %1394 = vmatpush1.msra.mxu0 0.0
      %1395 = vmatprep.subr.mxu0 0.0
      %1396 = vmatpush1.msra.mxu0 0.0
      %1397 = vmatprep.subr.mxu0 0.0
      %1398 = vmatpush1.msra.mxu0 0.0
      %1399 = vmatprep.subr.mxu0 0.0
      %1400 = vmatpush1.msra.mxu0 0.0
      %1401 = vmatprep.subr.mxu0 0.0
      %1402 = vmatpush1.msra.mxu0 0.0
      %1403 = vmatprep.subr.mxu0 0.0
      %1404 = vmatpush1.msra.mxu0 0.0
      %1405 = vmatprep.subr.mxu0 0.0
      %1406 = vmatpush1.msra.mxu0 0.0
      %1407 = vmatprep.subr.mxu0 0.0
      %1408 = vmatpush1.msra.mxu0 0.0
      %1409 = vmatprep.mubr.f32.mxu0 0.0
      %1410 = vmatmul.mubr.f32.gmra.mrb[0].mxu0 %v1337
      %v1411 = vpop.f32.mrb[0].mxu0
      %v1412 = vadd.f32 %v1332, %v1411
      %v1413 = vpop.f32.mrb[0].mxu0
      %v1414 = vadd.f32 %v1334, %v1413
      %1415 = vdwg.mxu0
      %1416 = vrot.lane.b32.xlu0 %v1241, 16
      %v1417 = vpop.permute.xlu0 %1416
      %1418 = vrot.lane.b32.xlu0 %v1242, 16
      %v1419 = vpop.permute.xlu0 %1418
      %v1420 = vsel %vm474, %v1417, %v1419
      %v1421 = vsel %vm474, %v1419, %v1417
      %v1422 = vmul.f32 %v1421, %v483
      %v1423 = vmul.f32 %v1420, %v487
      %s1424 = scalar_lea.vmem %s3, 4
      %v1425 = vld [vmem:[%s1424] sm:$0xf]
      %v1427 = vsel %vm310, %v1425, 0
      %v1430 = vsel %vm314, %v1422, 0
      %v1433 = vsel %vm314, %v1423, 0
      %1435 = vmatprep.subr.mxu0 %v1433
      %1436 = vmatpush1.msra.mxu0 %v1430
      %1437 = vmatprep.subr.mxu0 0.0
      %1438 = vmatpush1.msra.mxu0 0.0
      %1439 = vmatprep.subr.mxu0 0.0
      %1440 = vmatpush1.msra.mxu0 0.0
      %1441 = vmatprep.subr.mxu0 0.0
      %1442 = vmatpush1.msra.mxu0 0.0
      %1443 = vmatprep.subr.mxu0 0.0
      %1444 = vmatpush1.msra.mxu0 0.0
      %1445 = vmatprep.subr.mxu0 0.0
      %1446 = vmatpush1.msra.mxu0 0.0
      %1447 = vmatprep.subr.mxu0 0.0
      %1448 = vmatpush1.msra.mxu0 0.0
      %1449 = vmatprep.subr.mxu0 0.0
      %1450 = vmatpush1.msra.mxu0 0.0
      %1451 = vmatprep.subr.mxu0 0.0
      %1452 = vmatpush1.msra.mxu0 0.0
      %1453 = vmatprep.subr.mxu0 0.0
      %1454 = vmatpush1.msra.mxu0 0.0
      %1455 = vmatprep.subr.mxu0 0.0
      %1456 = vmatpush1.msra.mxu0 0.0
      %1457 = vmatprep.subr.mxu0 0.0
      %1458 = vmatpush1.msra.mxu0 0.0
      %1459 = vmatprep.subr.mxu0 0.0
      %1460 = vmatpush1.msra.mxu0 0.0
      %1461 = vmatprep.subr.mxu0 0.0
      %1462 = vmatpush1.msra.mxu0 0.0
      %1463 = vmatprep.subr.mxu0 0.0
      %1464 = vmatpush1.msra.mxu0 0.0
      %1465 = vmatprep.subr.mxu0 0.0
      %1466 = vmatpush1.msra.mxu0 0.0
      %1467 = vmatprep.subr.mxu0 0.0
      %1468 = vmatpush1.msra.mxu0 0.0
      %1469 = vmatprep.subr.mxu0 0.0
      %1470 = vmatpush1.msra.mxu0 0.0
      %1471 = vmatprep.subr.mxu0 0.0
      %1472 = vmatpush1.msra.mxu0 0.0
      %1473 = vmatprep.subr.mxu0 0.0
      %1474 = vmatpush1.msra.mxu0 0.0
      %1475 = vmatprep.subr.mxu0 0.0
      %1476 = vmatpush1.msra.mxu0 0.0
      %1477 = vmatprep.subr.mxu0 0.0
      %1478 = vmatpush1.msra.mxu0 0.0
      %1479 = vmatprep.subr.mxu0 0.0
      %1480 = vmatpush1.msra.mxu0 0.0
      %1481 = vmatprep.subr.mxu0 0.0
      %1482 = vmatpush1.msra.mxu0 0.0
      %1483 = vmatprep.subr.mxu0 0.0
      %1484 = vmatpush1.msra.mxu0 0.0
      %1485 = vmatprep.subr.mxu0 0.0
      %1486 = vmatpush1.msra.mxu0 0.0
      %1487 = vmatprep.subr.mxu0 0.0
      %1488 = vmatpush1.msra.mxu0 0.0
      %1489 = vmatprep.subr.mxu0 0.0
      %1490 = vmatpush1.msra.mxu0 0.0
      %1491 = vmatprep.subr.mxu0 0.0
      %1492 = vmatpush1.msra.mxu0 0.0
      %1493 = vmatprep.subr.mxu0 0.0
      %1494 = vmatpush1.msra.mxu0 0.0
      %1495 = vmatprep.subr.mxu0 0.0
      %1496 = vmatpush1.msra.mxu0 0.0
      %1497 = vmatprep.subr.mxu0 0.0
      %1498 = vmatpush1.msra.mxu0 0.0
      %1499 = vmatprep.mubr.f32.mxu0 0.0
      %1500 = vmatmul.mubr.f32.gmra.mrb[0].mxu0 %v1427
      %v1501 = vpop.f32.mrb[0].mxu0
      %v1502 = vadd.f32 0.0, %v1501
      %v1503 = vpop.f32.mrb[0].mxu0
      %v1504 = vadd.f32 0.0, %v1503
      %1505 = vdwg.mxu0
      %v1506 = vadd.f32 %v1412, %v1502
      %v1507 = vadd.f32 %v1414, %v1504
      %1508 = vrot.lane.b32.xlu0 %v1241, 15
      %v1509 = vpop.permute.xlu0 %1508
      %1510 = vrot.lane.b32.xlu0 %v1242, 15
      %v1511 = vpop.permute.xlu0 %1510
      %v1512 = vsel %vm580, %v1509, %v1511
      %v1513 = vsel %vm580, %v1511, %v1509
      %v1514 = vmul.f32 %v1513, %v589
      %v1515 = vmul.f32 %v1512, %v593
      %s1516 = scalar_lea.vmem %s3, 8
      %v1517 = vld [vmem:[%s1516] sm:$0xf]
      %v1519 = vsel %vm310, %v1517, 0
      %v1522 = vsel %vm314, %v1514, 0
      %v1525 = vsel %vm314, %v1515, 0
      %1527 = vmatprep.subr.mxu0 %v1525
      %1528 = vmatpush1.msra.mxu0 %v1522
      %1529 = vmatprep.subr.mxu0 0.0
      %1530 = vmatpush1.msra.mxu0 0.0
      %1531 = vmatprep.subr.mxu0 0.0
      %1532 = vmatpush1.msra.mxu0 0.0
      %1533 = vmatprep.subr.mxu0 0.0
      %1534 = vmatpush1.msra.mxu0 0.0
      %1535 = vmatprep.subr.mxu0 0.0
      %1536 = vmatpush1.msra.mxu0 0.0
      %1537 = vmatprep.subr.mxu0 0.0
      %1538 = vmatpush1.msra.mxu0 0.0
      %1539 = vmatprep.subr.mxu0 0.0
      %1540 = vmatpush1.msra.mxu0 0.0
      %1541 = vmatprep.subr.mxu0 0.0
      %1542 = vmatpush1.msra.mxu0 0.0
      %1543 = vmatprep.subr.mxu0 0.0
      %1544 = vmatpush1.msra.mxu0 0.0
      %1545 = vmatprep.subr.mxu0 0.0
      %1546 = vmatpush1.msra.mxu0 0.0
      %1547 = vmatprep.subr.mxu0 0.0
      %1548 = vmatpush1.msra.mxu0 0.0
      %1549 = vmatprep.subr.mxu0 0.0
      %1550 = vmatpush1.msra.mxu0 0.0
      %1551 = vmatprep.subr.mxu0 0.0
      %1552 = vmatpush1.msra.mxu0 0.0
      %1553 = vmatprep.subr.mxu0 0.0
      %1554 = vmatpush1.msra.mxu0 0.0
      %1555 = vmatprep.subr.mxu0 0.0
      %1556 = vmatpush1.msra.mxu0 0.0
      %1557 = vmatprep.subr.mxu0 0.0
      %1558 = vmatpush1.msra.mxu0 0.0
      %1559 = vmatprep.subr.mxu0 0.0
      %1560 = vmatpush1.msra.mxu0 0.0
      %1561 = vmatprep.subr.mxu0 0.0
      %1562 = vmatpush1.msra.mxu0 0.0
      %1563 = vmatprep.subr.mxu0 0.0
      %1564 = vmatpush1.msra.mxu0 0.0
      %1565 = vmatprep.subr.mxu0 0.0
      %1566 = vmatpush1.msra.mxu0 0.0
      %1567 = vmatprep.subr.mxu0 0.0
      %1568 = vmatpush1.msra.mxu0 0.0
      %1569 = vmatprep.subr.mxu0 0.0
      %1570 = vmatpush1.msra.mxu0 0.0
      %1571 = vmatprep.subr.mxu0 0.0
      %1572 = vmatpush1.msra.mxu0 0.0
      %1573 = vmatprep.subr.mxu0 0.0
      %1574 = vmatpush1.msra.mxu0 0.0
      %1575 = vmatprep.subr.mxu0 0.0
      %1576 = vmatpush1.msra.mxu0 0.0
      %1577 = vmatprep.subr.mxu0 0.0
      %1578 = vmatpush1.msra.mxu0 0.0
      %1579 = vmatprep.subr.mxu0 0.0
      %1580 = vmatpush1.msra.mxu0 0.0
      %1581 = vmatprep.subr.mxu0 0.0
      %1582 = vmatpush1.msra.mxu0 0.0
      %1583 = vmatprep.subr.mxu0 0.0
      %1584 = vmatpush1.msra.mxu0 0.0
      %1585 = vmatprep.subr.mxu0 0.0
      %1586 = vmatpush1.msra.mxu0 0.0
      %1587 = vmatprep.subr.mxu0 0.0
      %1588 = vmatpush1.msra.mxu0 0.0
      %1589 = vmatprep.subr.mxu0 0.0
      %1590 = vmatpush1.msra.mxu0 0.0
      %1591 = vmatprep.mubr.f32.mxu0 0.0
      %1592 = vmatmul.mubr.f32.gmra.mrb[0].mxu0 %v1519
      %v1593 = vpop.f32.mrb[0].mxu0
      %v1594 = vadd.f32 0.0, %v1593
      %v1595 = vpop.f32.mrb[0].mxu0
      %v1596 = vadd.f32 0.0, %v1595
      %1597 = vdwg.mxu0
      %v1598 = vadd.f32 %v1506, %v1594
      %v1599 = vadd.f32 %v1507, %v1596
      %1600 = vrot.lane.b32.xlu0 %v1241, 1
      %v1601 = vpop.permute.xlu0 %1600
      %1602 = vrot.lane.b32.xlu0 %v1242, 1
      %v1603 = vpop.permute.xlu0 %1602
      %v1604 = vsel %vm686, %v1601, %v1603
      %v1605 = vsel %vm686, %v1603, %v1601
      %v1606 = vmul.f32 %v1605, %v695
      %v1607 = vmul.f32 %v1604, %v699
      %s1608 = scalar_lea.vmem %s3, 12
      %v1609 = vld [vmem:[%s1608] sm:$0xf]
      %v1611 = vsel %vm310, %v1609, 0
      %v1614 = vsel %vm314, %v1606, 0
      %v1617 = vsel %vm314, %v1607, 0
      %1619 = vmatprep.subr.mxu0 %v1617
      %1620 = vmatpush1.msra.mxu0 %v1614
      %1621 = vmatprep.subr.mxu0 0.0
      %1622 = vmatpush1.msra.mxu0 0.0
      %1623 = vmatprep.subr.mxu0 0.0
      %1624 = vmatpush1.msra.mxu0 0.0
      %1625 = vmatprep.subr.mxu0 0.0
      %1626 = vmatpush1.msra.mxu0 0.0
      %1627 = vmatprep.subr.mxu0 0.0
      %1628 = vmatpush1.msra.mxu0 0.0
      %1629 = vmatprep.subr.mxu0 0.0
      %1630 = vmatpush1.msra.mxu0 0.0
      %1631 = vmatprep.subr.mxu0 0.0
      %1632 = vmatpush1.msra.mxu0 0.0
      %1633 = vmatprep.subr.mxu0 0.0
      %1634 = vmatpush1.msra.mxu0 0.0
      %1635 = vmatprep.subr.mxu0 0.0
      %1636 = vmatpush1.msra.mxu0 0.0
      %1637 = vmatprep.subr.mxu0 0.0
      %1638 = vmatpush1.msra.mxu0 0.0
      %1639 = vmatprep.subr.mxu0 0.0
      %1640 = vmatpush1.msra.mxu0 0.0
      %1641 = vmatprep.subr.mxu0 0.0
      %1642 = vmatpush1.msra.mxu0 0.0
      %1643 = vmatprep.subr.mxu0 0.0
      %1644 = vmatpush1.msra.mxu0 0.0
      %1645 = vmatprep.subr.mxu0 0.0
      %1646 = vmatpush1.msra.mxu0 0.0
      %1647 = vmatprep.subr.mxu0 0.0
      %1648 = vmatpush1.msra.mxu0 0.0
      %1649 = vmatprep.subr.mxu0 0.0
      %1650 = vmatpush1.msra.mxu0 0.0
      %1651 = vmatprep.subr.mxu0 0.0
      %1652 = vmatpush1.msra.mxu0 0.0
      %1653 = vmatprep.subr.mxu0 0.0
      %1654 = vmatpush1.msra.mxu0 0.0
      %1655 = vmatprep.subr.mxu0 0.0
      %1656 = vmatpush1.msra.mxu0 0.0
      %1657 = vmatprep.subr.mxu0 0.0
      %1658 = vmatpush1.msra.mxu0 0.0
      %1659 = vmatprep.subr.mxu0 0.0
      %1660 = vmatpush1.msra.mxu0 0.0
      %1661 = vmatprep.subr.mxu0 0.0
      %1662 = vmatpush1.msra.mxu0 0.0
      %1663 = vmatprep.subr.mxu0 0.0
      %1664 = vmatpush1.msra.mxu0 0.0
      %1665 = vmatprep.subr.mxu0 0.0
      %1666 = vmatpush1.msra.mxu0 0.0
      %1667 = vmatprep.subr.mxu0 0.0
      %1668 = vmatpush1.msra.mxu0 0.0
      %1669 = vmatprep.subr.mxu0 0.0
      %1670 = vmatpush1.msra.mxu0 0.0
      %1671 = vmatprep.subr.mxu0 0.0
      %1672 = vmatpush1.msra.mxu0 0.0
      %1673 = vmatprep.subr.mxu0 0.0
      %1674 = vmatpush1.msra.mxu0 0.0
      %1675 = vmatprep.subr.mxu0 0.0
      %1676 = vmatpush1.msra.mxu0 0.0
      %1677 = vmatprep.subr.mxu0 0.0
      %1678 = vmatpush1.msra.mxu0 0.0
      %1679 = vmatprep.subr.mxu0 0.0
      %1680 = vmatpush1.msra.mxu0 0.0
      %1681 = vmatprep.subr.mxu0 0.0
      %1682 = vmatpush1.msra.mxu0 0.0
      %1683 = vmatprep.mubr.f32.mxu0 0.0
      %1684 = vmatmul.mubr.f32.gmra.mrb[0].mxu0 %v1611
      %v1685 = vpop.f32.mrb[0].mxu0
      %v1686 = vadd.f32 0.0, %v1685
      %v1687 = vpop.f32.mrb[0].mxu0
      %v1688 = vadd.f32 0.0, %v1687
      %1689 = vdwg.mxu0
      %v1690 = vadd.f32 %v1598, %v1686
      %v1691 = vadd.f32 %v1599, %v1688
      %1692 = vrot.lane.b32.xlu0 %v1241, 127
      %v1693 = vpop.permute.xlu0 %1692
      %1694 = vrot.lane.b32.xlu0 %v1242, 127
      %v1695 = vpop.permute.xlu0 %1694
      %v1696 = vsel %vm792, %v1693, %v1695
      %v1697 = vsel %vm792, %v1695, %v1693
      %v1698 = vmul.f32 %v1696, %v801
      %v1699 = vmul.f32 %v1697, %v805
      %s1700 = scalar_lea.vmem %s3, 20
      %v1701 = vld [vmem:[%s1700] sm:$0xf]
      %v1703 = vsel %vm310, %v1701, 0
      %v1706 = vsel %vm314, %v1698, 0
      %v1709 = vsel %vm314, %v1699, 0
      %1711 = vmatprep.subr.mxu0 %v1709
      %1712 = vmatpush1.msra.mxu0 %v1706
      %1713 = vmatprep.subr.mxu0 0.0
      %1714 = vmatpush1.msra.mxu0 0.0
      %1715 = vmatprep.subr.mxu0 0.0
      %1716 = vmatpush1.msra.mxu0 0.0
      %1717 = vmatprep.subr.mxu0 0.0
      %1718 = vmatpush1.msra.mxu0 0.0
      %1719 = vmatprep.subr.mxu0 0.0
      %1720 = vmatpush1.msra.mxu0 0.0
      %1721 = vmatprep.subr.mxu0 0.0
      %1722 = vmatpush1.msra.mxu0 0.0
      %1723 = vmatprep.subr.mxu0 0.0
      %1724 = vmatpush1.msra.mxu0 0.0
      %1725 = vmatprep.subr.mxu0 0.0
      %1726 = vmatpush1.msra.mxu0 0.0
      %1727 = vmatprep.subr.mxu0 0.0
      %1728 = vmatpush1.msra.mxu0 0.0
      %1729 = vmatprep.subr.mxu0 0.0
      %1730 = vmatpush1.msra.mxu0 0.0
      %1731 = vmatprep.subr.mxu0 0.0
      %1732 = vmatpush1.msra.mxu0 0.0
      %1733 = vmatprep.subr.mxu0 0.0
      %1734 = vmatpush1.msra.mxu0 0.0
      %1735 = vmatprep.subr.mxu0 0.0
      %1736 = vmatpush1.msra.mxu0 0.0
      %1737 = vmatprep.subr.mxu0 0.0
      %1738 = vmatpush1.msra.mxu0 0.0
      %1739 = vmatprep.subr.mxu0 0.0
      %1740 = vmatpush1.msra.mxu0 0.0
      %1741 = vmatprep.subr.mxu0 0.0
      %1742 = vmatpush1.msra.mxu0 0.0
      %1743 = vmatprep.subr.mxu0 0.0
      %1744 = vmatpush1.msra.mxu0 0.0
      %1745 = vmatprep.subr.mxu0 0.0
      %1746 = vmatpush1.msra.mxu0 0.0
      %1747 = vmatprep.subr.mxu0 0.0
      %1748 = vmatpush1.msra.mxu0 0.0
      %1749 = vmatprep.subr.mxu0 0.0
      %1750 = vmatpush1.msra.mxu0 0.0
      %1751 = vmatprep.subr.mxu0 0.0
      %1752 = vmatpush1.msra.mxu0 0.0
      %1753 = vmatprep.subr.mxu0 0.0
      %1754 = vmatpush1.msra.mxu0 0.0
      %1755 = vmatprep.subr.mxu0 0.0
      %1756 = vmatpush1.msra.mxu0 0.0
      %1757 = vmatprep.subr.mxu0 0.0
      %1758 = vmatpush1.msra.mxu0 0.0
      %1759 = vmatprep.subr.mxu0 0.0
      %1760 = vmatpush1.msra.mxu0 0.0
      %1761 = vmatprep.subr.mxu0 0.0
      %1762 = vmatpush1.msra.mxu0 0.0
      %1763 = vmatprep.subr.mxu0 0.0
      %1764 = vmatpush1.msra.mxu0 0.0
      %1765 = vmatprep.subr.mxu0 0.0
      %1766 = vmatpush1.msra.mxu0 0.0
      %1767 = vmatprep.subr.mxu0 0.0
      %1768 = vmatpush1.msra.mxu0 0.0
      %1769 = vmatprep.subr.mxu0 0.0
      %1770 = vmatpush1.msra.mxu0 0.0
      %1771 = vmatprep.subr.mxu0 0.0
      %1772 = vmatpush1.msra.mxu0 0.0
      %1773 = vmatprep.subr.mxu0 0.0
      %1774 = vmatpush1.msra.mxu0 0.0
      %1775 = vmatprep.mubr.f32.mxu0 0.0
      %1776 = vmatmul.mubr.f32.gmra.mrb[0].mxu0 %v1703
      %v1777 = vpop.f32.mrb[0].mxu0
      %v1778 = vadd.f32 0.0, %v1777
      %v1779 = vpop.f32.mrb[0].mxu0
      %v1780 = vadd.f32 0.0, %v1779
      %1781 = vdwg.mxu0
      %v1782 = vadd.f32 %v1690, %v1778
      %v1783 = vadd.f32 %v1691, %v1780
      %1784 = vrot.lane.b32.xlu0 %v1241, 113
      %v1785 = vpop.permute.xlu0 %1784
      %1786 = vrot.lane.b32.xlu0 %v1242, 113
      %v1787 = vpop.permute.xlu0 %1786
      %v1788 = vsel %vm898, %v1785, %v1787
      %v1789 = vsel %vm898, %v1787, %v1785
      %v1790 = vmul.f32 %v1788, %v907
      %v1791 = vmul.f32 %v1789, %v911
      %s1792 = scalar_lea.vmem %s3, 24
      %v1793 = vld [vmem:[%s1792] sm:$0xf]
      %v1795 = vsel %vm310, %v1793, 0
      %v1798 = vsel %vm314, %v1790, 0
      %v1801 = vsel %vm314, %v1791, 0
      %1803 = vmatprep.subr.mxu0 %v1801
      %1804 = vmatpush1.msra.mxu0 %v1798
      %1805 = vmatprep.subr.mxu0 0.0
      %1806 = vmatpush1.msra.mxu0 0.0
      %1807 = vmatprep.subr.mxu0 0.0
      %1808 = vmatpush1.msra.mxu0 0.0
      %1809 = vmatprep.subr.mxu0 0.0
      %1810 = vmatpush1.msra.mxu0 0.0
      %1811 = vmatprep.subr.mxu0 0.0
      %1812 = vmatpush1.msra.mxu0 0.0
      %1813 = vmatprep.subr.mxu0 0.0
      %1814 = vmatpush1.msra.mxu0 0.0
      %1815 = vmatprep.subr.mxu0 0.0
      %1816 = vmatpush1.msra.mxu0 0.0
      %1817 = vmatprep.subr.mxu0 0.0
      %1818 = vmatpush1.msra.mxu0 0.0
      %1819 = vmatprep.subr.mxu0 0.0
      %1820 = vmatpush1.msra.mxu0 0.0
      %1821 = vmatprep.subr.mxu0 0.0
      %1822 = vmatpush1.msra.mxu0 0.0
      %1823 = vmatprep.subr.mxu0 0.0
      %1824 = vmatpush1.msra.mxu0 0.0
      %1825 = vmatprep.subr.mxu0 0.0
      %1826 = vmatpush1.msra.mxu0 0.0
      %1827 = vmatprep.subr.mxu0 0.0
      %1828 = vmatpush1.msra.mxu0 0.0
      %1829 = vmatprep.subr.mxu0 0.0
      %1830 = vmatpush1.msra.mxu0 0.0
      %1831 = vmatprep.subr.mxu0 0.0
      %1832 = vmatpush1.msra.mxu0 0.0
      %1833 = vmatprep.subr.mxu0 0.0
      %1834 = vmatpush1.msra.mxu0 0.0
      %1835 = vmatprep.subr.mxu0 0.0
      %1836 = vmatpush1.msra.mxu0 0.0
      %1837 = vmatprep.subr.mxu0 0.0
      %1838 = vmatpush1.msra.mxu0 0.0
      %1839 = vmatprep.subr.mxu0 0.0
      %1840 = vmatpush1.msra.mxu0 0.0
      %1841 = vmatprep.subr.mxu0 0.0
      %1842 = vmatpush1.msra.mxu0 0.0
      %1843 = vmatprep.subr.mxu0 0.0
      %1844 = vmatpush1.msra.mxu0 0.0
      %1845 = vmatprep.subr.mxu0 0.0
      %1846 = vmatpush1.msra.mxu0 0.0
      %1847 = vmatprep.subr.mxu0 0.0
      %1848 = vmatpush1.msra.mxu0 0.0
      %1849 = vmatprep.subr.mxu0 0.0
      %1850 = vmatpush1.msra.mxu0 0.0
      %1851 = vmatprep.subr.mxu0 0.0
      %1852 = vmatpush1.msra.mxu0 0.0
      %1853 = vmatprep.subr.mxu0 0.0
      %1854 = vmatpush1.msra.mxu0 0.0
      %1855 = vmatprep.subr.mxu0 0.0
      %1856 = vmatpush1.msra.mxu0 0.0
      %1857 = vmatprep.subr.mxu0 0.0
      %1858 = vmatpush1.msra.mxu0 0.0
      %1859 = vmatprep.subr.mxu0 0.0
      %1860 = vmatpush1.msra.mxu0 0.0
      %1861 = vmatprep.subr.mxu0 0.0
      %1862 = vmatpush1.msra.mxu0 0.0
      %1863 = vmatprep.subr.mxu0 0.0
      %1864 = vmatpush1.msra.mxu0 0.0
      %1865 = vmatprep.subr.mxu0 0.0
      %1866 = vmatpush1.msra.mxu0 0.0
      %1867 = vmatprep.mubr.f32.mxu0 0.0
      %1868 = vmatmul.mubr.f32.gmra.mrb[0].mxu0 %v1795
      %v1869 = vpop.f32.mrb[0].mxu0
      %v1870 = vadd.f32 0.0, %v1869
      %v1871 = vpop.f32.mrb[0].mxu0
      %v1872 = vadd.f32 0.0, %v1871
      %1873 = vdwg.mxu0
      %v1874 = vadd.f32 %v1782, %v1870
      %v1875 = vadd.f32 %v1783, %v1872
      %1876 = vrot.lane.b32.xlu0 %v1241, 112
      %v1877 = vpop.permute.xlu0 %1876
      %1878 = vrot.lane.b32.xlu0 %v1242, 112
      %v1879 = vpop.permute.xlu0 %1878
      %v1880 = vsel %vm1004, %v1877, %v1879
      %v1881 = vsel %vm1004, %v1879, %v1877
      %v1882 = vmul.f32 %v1880, %v1013
      %v1883 = vmul.f32 %v1881, %v1017
      %s1884 = scalar_lea.vmem %s3, 28
      %v1885 = vld [vmem:[%s1884] sm:$0xf]
      %v1887 = vsel %vm310, %v1885, 0
      %v1890 = vsel %vm314, %v1882, 0
      %v1893 = vsel %vm314, %v1883, 0
      %1895 = vmatprep.subr.mxu0 %v1893
      %1896 = vmatpush1.msra.mxu0 %v1890
      %1897 = vmatprep.subr.mxu0 0.0
      %1898 = vmatpush1.msra.mxu0 0.0
      %1899 = vmatprep.subr.mxu0 0.0
      %1900 = vmatpush1.msra.mxu0 0.0
      %1901 = vmatprep.subr.mxu0 0.0
      %1902 = vmatpush1.msra.mxu0 0.0
      %1903 = vmatprep.subr.mxu0 0.0
      %1904 = vmatpush1.msra.mxu0 0.0
      %1905 = vmatprep.subr.mxu0 0.0
      %1906 = vmatpush1.msra.mxu0 0.0
      %1907 = vmatprep.subr.mxu0 0.0
      %1908 = vmatpush1.msra.mxu0 0.0
      %1909 = vmatprep.subr.mxu0 0.0
      %1910 = vmatpush1.msra.mxu0 0.0
      %1911 = vmatprep.subr.mxu0 0.0
      %1912 = vmatpush1.msra.mxu0 0.0
      %1913 = vmatprep.subr.mxu0 0.0
      %1914 = vmatpush1.msra.mxu0 0.0
      %1915 = vmatprep.subr.mxu0 0.0
      %1916 = vmatpush1.msra.mxu0 0.0
      %1917 = vmatprep.subr.mxu0 0.0
      %1918 = vmatpush1.msra.mxu0 0.0
      %1919 = vmatprep.subr.mxu0 0.0
      %1920 = vmatpush1.msra.mxu0 0.0
      %1921 = vmatprep.subr.mxu0 0.0
      %1922 = vmatpush1.msra.mxu0 0.0
      %1923 = vmatprep.subr.mxu0 0.0
      %1924 = vmatpush1.msra.mxu0 0.0
      %1925 = vmatprep.subr.mxu0 0.0
      %1926 = vmatpush1.msra.mxu0 0.0
      %1927 = vmatprep.subr.mxu0 0.0
      %1928 = vmatpush1.msra.mxu0 0.0
      %1929 = vmatprep.subr.mxu0 0.0
      %1930 = vmatpush1.msra.mxu0 0.0
      %1931 = vmatprep.subr.mxu0 0.0
      %1932 = vmatpush1.msra.mxu0 0.0
      %1933 = vmatprep.subr.mxu0 0.0
      %1934 = vmatpush1.msra.mxu0 0.0
      %1935 = vmatprep.subr.mxu0 0.0
      %1936 = vmatpush1.msra.mxu0 0.0
      %1937 = vmatprep.subr.mxu0 0.0
      %1938 = vmatpush1.msra.mxu0 0.0
      %1939 = vmatprep.subr.mxu0 0.0
      %1940 = vmatpush1.msra.mxu0 0.0
      %1941 = vmatprep.subr.mxu0 0.0
      %1942 = vmatpush1.msra.mxu0 0.0
      %1943 = vmatprep.subr.mxu0 0.0
      %1944 = vmatpush1.msra.mxu0 0.0
      %1945 = vmatprep.subr.mxu0 0.0
      %1946 = vmatpush1.msra.mxu0 0.0
      %1947 = vmatprep.subr.mxu0 0.0
      %1948 = vmatpush1.msra.mxu0 0.0
      %1949 = vmatprep.subr.mxu0 0.0
      %1950 = vmatpush1.msra.mxu0 0.0
      %1951 = vmatprep.subr.mxu0 0.0
      %1952 = vmatpush1.msra.mxu0 0.0
      %1953 = vmatprep.subr.mxu0 0.0
      %1954 = vmatpush1.msra.mxu0 0.0
      %1955 = vmatprep.subr.mxu0 0.0
      %1956 = vmatpush1.msra.mxu0 0.0
      %1957 = vmatprep.subr.mxu0 0.0
      %1958 = vmatpush1.msra.mxu0 0.0
      %1959 = vmatprep.mubr.f32.mxu0 0.0
      %1960 = vmatmul.mubr.f32.gmra.mrb[0].mxu0 %v1887
      %v1961 = vpop.f32.mrb[0].mxu0
      %v1962 = vadd.f32 0.0, %v1961
      %v1963 = vpop.f32.mrb[0].mxu0
      %v1964 = vadd.f32 0.0, %v1963
      %1965 = vdwg.mxu0
      %v1966 = vadd.f32 %v1874, %v1962
      %v1967 = vadd.f32 %v1875, %v1964
      %1968 = vrot.lane.b32.xlu0 %v1241, 111
      %v1969 = vpop.permute.xlu0 %1968
      %1970 = vrot.lane.b32.xlu0 %v1242, 111
      %v1971 = vpop.permute.xlu0 %1970
      %v1972 = vsel %vm1110, %v1969, %v1971
      %v1973 = vsel %vm1110, %v1971, %v1969
      %v1974 = vmul.f32 %v1972, %v1119
      %v1975 = vmul.f32 %v1973, %v1123
      %s1976 = scalar_lea.vmem %s3, 32
      %v1977 = vld [vmem:[%s1976] sm:$0xf]
      %v1979 = vsel %vm310, %v1977, 0
      %v1982 = vsel %vm314, %v1974, 0
      %v1985 = vsel %vm314, %v1975, 0
      %1987 = vmatprep.subr.mxu0 %v1985
      %1988 = vmatpush1.msra.mxu0 %v1982
      %1989 = vmatprep.subr.mxu0 0.0
      %1990 = vmatpush1.msra.mxu0 0.0
      %1991 = vmatprep.subr.mxu0 0.0
      %1992 = vmatpush1.msra.mxu0 0.0
      %1993 = vmatprep.subr.mxu0 0.0
      %1994 = vmatpush1.msra.mxu0 0.0
      %1995 = vmatprep.subr.mxu0 0.0
      %1996 = vmatpush1.msra.mxu0 0.0
      %1997 = vmatprep.subr.mxu0 0.0
      %1998 = vmatpush1.msra.mxu0 0.0
      %1999 = vmatprep.subr.mxu0 0.0
      %2000 = vmatpush1.msra.mxu0 0.0
      %2001 = vmatprep.subr.mxu0 0.0
      %2002 = vmatpush1.msra.mxu0 0.0
      %2003 = vmatprep.subr.mxu0 0.0
      %2004 = vmatpush1.msra.mxu0 0.0
      %2005 = vmatprep.subr.mxu0 0.0
      %2006 = vmatpush1.msra.mxu0 0.0
      %2007 = vmatprep.subr.mxu0 0.0
      %2008 = vmatpush1.msra.mxu0 0.0
      %2009 = vmatprep.subr.mxu0 0.0
      %2010 = vmatpush1.msra.mxu0 0.0
      %2011 = vmatprep.subr.mxu0 0.0
      %2012 = vmatpush1.msra.mxu0 0.0
      %2013 = vmatprep.subr.mxu0 0.0
      %2014 = vmatpush1.msra.mxu0 0.0
      %2015 = vmatprep.subr.mxu0 0.0
      %2016 = vmatpush1.msra.mxu0 0.0
      %2017 = vmatprep.subr.mxu0 0.0
      %2018 = vmatpush1.msra.mxu0 0.0
      %2019 = vmatprep.subr.mxu0 0.0
      %2020 = vmatpush1.msra.mxu0 0.0
      %2021 = vmatprep.subr.mxu0 0.0
      %2022 = vmatpush1.msra.mxu0 0.0
      %2023 = vmatprep.subr.mxu0 0.0
      %2024 = vmatpush1.msra.mxu0 0.0
      %2025 = vmatprep.subr.mxu0 0.0
      %2026 = vmatpush1.msra.mxu0 0.0
      %2027 = vmatprep.subr.mxu0 0.0
      %2028 = vmatpush1.msra.mxu0 0.0
      %2029 = vmatprep.subr.mxu0 0.0
      %2030 = vmatpush1.msra.mxu0 0.0
      %2031 = vmatprep.subr.mxu0 0.0
      %2032 = vmatpush1.msra.mxu0 0.0
      %2033 = vmatprep.subr.mxu0 0.0
      %2034 = vmatpush1.msra.mxu0 0.0
      %2035 = vmatprep.subr.mxu0 0.0
      %2036 = vmatpush1.msra.mxu0 0.0
      %2037 = vmatprep.subr.mxu0 0.0
      %2038 = vmatpush1.msra.mxu0 0.0
      %2039 = vmatprep.subr.mxu0 0.0
      %2040 = vmatpush1.msra.mxu0 0.0
      %2041 = vmatprep.subr.mxu0 0.0
      %2042 = vmatpush1.msra.mxu0 0.0
      %2043 = vmatprep.subr.mxu0 0.0
      %2044 = vmatpush1.msra.mxu0 0.0
      %2045 = vmatprep.subr.mxu0 0.0
      %2046 = vmatpush1.msra.mxu0 0.0
      %2047 = vmatprep.subr.mxu0 0.0
      %2048 = vmatpush1.msra.mxu0 0.0
      %2049 = vmatprep.subr.mxu0 0.0
      %2050 = vmatpush1.msra.mxu0 0.0
      %2051 = vmatprep.mubr.f32.mxu0 0.0
      %2052 = vmatmul.mubr.f32.gmra.mrb[0].mxu0 %v1979
      %v2053 = vpop.f32.mrb[0].mxu0
      %v2054 = vadd.f32 0.0, %v2053
      %v2055 = vpop.f32.mrb[0].mxu0
      %v2056 = vadd.f32 0.0, %v2055
      %2057 = vdwg.mxu0
      %v2058 = vadd.f32 %v1966, %v2054
      %v2059 = vadd.f32 %v1967, %v2056
      %2061 = vset.pattern.permute.xlu0 0
      %2062 = vperm.xlu0 %2061, %v1244
      %v2063 = vpop.permute.xlu0 %2062
      %v2065 = vadd.f32 %v2058, %v2063
      %v2066 = vadd.f32 %v2059, %v2063
      %v2067 = vsel %vm314, %v2065, 0.0
      %v2068 = vsel %vm314, %v2066, 0.0
      %v2069 = vadd.f32 %v2067, %v2068
      %2070 = vadd.xlane.f32.xlu0 %v2069
      %v2071 = vpop.xlane.xlu0 %2070
      %v2072 = vmul.f32 %v2065, %v2065
      %v2073 = vmul.f32 %v2066, %v2066
      %v2074 = vsel %vm314, %v2072, 0.0
      %v2075 = vsel %vm314, %v2073, 0.0
      %v2076 = vadd.f32 %v2074, %v2075
      %2077 = vadd.xlane.f32.xlu0 %v2076
      %v2078 = vpop.xlane.xlu0 %2077
      %v2079 = vmul.f32 %v2071, 0.00390625
      %v2080 = vmul.f32 %v2078, 0.00390625
      %v2081 = vmul.f32 %v2079, %v2079
      %v2082 = vsub.f32 %v2080, %v2081
      %v2083 = vadd.f32 %v2082, 1e-05
      %v2084 = vrsqrt.pop %v2083
      %v2085 = vsub.f32 %v2065, %v2079
      %v2086 = vsub.f32 %v2066, %v2079
      %v2087 = vmul.f32 %v2085, %v2084
      %v2088 = vmul.f32 %v2086, %v2084
      %v2089 = vmax.f32 %v2087, 0.0
      %v2090 = vmax.f32 %v2088, 0.0
      %s2091 = scalar_lea.vmem %s6, 8
      %v2092 = vld [vmem:[%s2091] sm:$0xf]
      %v2093 = vld [vmem:[%s4] sm:$0xf]
      %2095 = vset.pattern.permute.xlu0 0
      %2096 = vperm.xlu0 %2095, %v2092
      %v2097 = vpop.permute.xlu0 %2096
      %v2100 = vsel %vm310, %v2093, 0
      %2102 = vmatprep.subr.mxu0 %v397
      %2103 = vmatpush1.msra.mxu0 %v395
      %2104 = vmatprep.subr.mxu0 0.0
      %2105 = vmatpush1.msra.mxu0 0.0
      %2106 = vmatprep.subr.mxu0 0.0
      %2107 = vmatpush1.msra.mxu0 0.0
      %2108 = vmatprep.subr.mxu0 0.0
      %2109 = vmatpush1.msra.mxu0 0.0
      %2110 = vmatprep.subr.mxu0 0.0
      %2111 = vmatpush1.msra.mxu0 0.0
      %2112 = vmatprep.subr.mxu0 0.0
      %2113 = vmatpush1.msra.mxu0 0.0
      %2114 = vmatprep.subr.mxu0 0.0
      %2115 = vmatpush1.msra.mxu0 0.0
      %2116 = vmatprep.subr.mxu0 0.0
      %2117 = vmatpush1.msra.mxu0 0.0
      %2118 = vmatprep.subr.mxu0 0.0
      %2119 = vmatpush1.msra.mxu0 0.0
      %2120 = vmatprep.subr.mxu0 0.0
      %2121 = vmatpush1.msra.mxu0 0.0
      %2122 = vmatprep.subr.mxu0 0.0
      %2123 = vmatpush1.msra.mxu0 0.0
      %2124 = vmatprep.subr.mxu0 0.0
      %2125 = vmatpush1.msra.mxu0 0.0
      %2126 = vmatprep.subr.mxu0 0.0
      %2127 = vmatpush1.msra.mxu0 0.0
      %2128 = vmatprep.subr.mxu0 0.0
      %2129 = vmatpush1.msra.mxu0 0.0
      %2130 = vmatprep.subr.mxu0 0.0
      %2131 = vmatpush1.msra.mxu0 0.0
      %2132 = vmatprep.subr.mxu0 0.0
      %2133 = vmatpush1.msra.mxu0 0.0
      %2134 = vmatprep.subr.mxu0 0.0
      %2135 = vmatpush1.msra.mxu0 0.0
      %2136 = vmatprep.subr.mxu0 0.0
      %2137 = vmatpush1.msra.mxu0 0.0
      %2138 = vmatprep.subr.mxu0 0.0
      %2139 = vmatpush1.msra.mxu0 0.0
      %2140 = vmatprep.subr.mxu0 0.0
      %2141 = vmatpush1.msra.mxu0 0.0
      %2142 = vmatprep.subr.mxu0 0.0
      %2143 = vmatpush1.msra.mxu0 0.0
      %2144 = vmatprep.subr.mxu0 0.0
      %2145 = vmatpush1.msra.mxu0 0.0
      %2146 = vmatprep.subr.mxu0 0.0
      %2147 = vmatpush1.msra.mxu0 0.0
      %2148 = vmatprep.subr.mxu0 0.0
      %2149 = vmatpush1.msra.mxu0 0.0
      %2150 = vmatprep.subr.mxu0 0.0
      %2151 = vmatpush1.msra.mxu0 0.0
      %2152 = vmatprep.subr.mxu0 0.0
      %2153 = vmatpush1.msra.mxu0 0.0
      %2154 = vmatprep.subr.mxu0 0.0
      %2155 = vmatpush1.msra.mxu0 0.0
      %2156 = vmatprep.subr.mxu0 0.0
      %2157 = vmatpush1.msra.mxu0 0.0
      %2158 = vmatprep.subr.mxu0 0.0
      %2159 = vmatpush1.msra.mxu0 0.0
      %2160 = vmatprep.subr.mxu0 0.0
      %2161 = vmatpush1.msra.mxu0 0.0
      %2162 = vmatprep.subr.mxu0 0.0
      %2163 = vmatpush1.msra.mxu0 0.0
      %2164 = vmatprep.subr.mxu0 0.0
      %2165 = vmatpush1.msra.mxu0 0.0
      %2166 = vmatprep.mubr.f32.mxu0 0.0
      %2167 = vmatmul.mubr.f32.gmra.mrb[0].mxu0 %v2100
      %v2168 = vpop.f32.mrb[0].mxu0
      %v2169 = vadd.f32 %v2097, %v2168
      %v2170 = vpop.f32.mrb[0].mxu0
      %v2171 = vadd.f32 %v2097, %v2170
      %2172 = vdwg.mxu0
      %v2173 = vsel %vm314, %v2169, 0.0
      %v2174 = vsel %vm314, %v2171, 0.0
      %v2175 = vadd.f32 %v2173, %v2174
      %2176 = vadd.xlane.f32.xlu0 %v2175
      %v2177 = vpop.xlane.xlu0 %2176
      %v2178 = vmul.f32 %v2169, %v2169
      %v2179 = vmul.f32 %v2171, %v2171
      %v2180 = vsel %vm314, %v2178, 0.0
      %v2181 = vsel %vm314, %v2179, 0.0
      %v2182 = vadd.f32 %v2180, %v2181
      %2183 = vadd.xlane.f32.xlu0 %v2182
      %v2184 = vpop.xlane.xlu0 %2183
      %v2185 = vmul.f32 %v2177, 0.00390625
      %v2186 = vmul.f32 %v2184, 0.00390625
      %v2187 = vmul.f32 %v2185, %v2185
      %v2188 = vsub.f32 %v2186, %v2187
      %v2189 = vadd.f32 %v2188, 1e-05
      %v2190 = vrsqrt.pop %v2189
      %v2191 = vsub.f32 %v2169, %v2185
      %v2192 = vsub.f32 %v2171, %v2185
      %v2193 = vmul.f32 %v2191, %v2190
      %v2194 = vmul.f32 %v2192, %v2190
      %v2195 = vmax.f32 %v2193, 0.0
      %v2196 = vmax.f32 %v2194, 0.0
      %v2197 = vadd.f32 %v2089, %v2195
      %v2198 = vadd.f32 %v2090, %v2196
      %s2199 = scalar_lea.vmem %s6, 12
      %v2200 = vld [vmem:[%s2199] sm:$0xf]
      %v2201 = vld [vmem:[%s5] sm:$0xf]
      %2203 = vset.pattern.permute.xlu0 0
      %2204 = vperm.xlu0 %2203, %v2200
      %v2205 = vpop.permute.xlu0 %2204
      %v2208 = vsel %vm310, %v2201, 0
      %v2211 = vsel %vm314, %v2197, 0
      %v2214 = vsel %vm314, %v2198, 0
      %2216 = vmatprep.subr.mxu0 %v2214
      %2217 = vmatpush1.msra.mxu0 %v2211
      %2218 = vmatprep.subr.mxu0 0.0
      %2219 = vmatpush1.msra.mxu0 0.0
      %2220 = vmatprep.subr.mxu0 0.0
      %2221 = vmatpush1.msra.mxu0 0.0
      %2222 = vmatprep.subr.mxu0 0.0
      %2223 = vmatpush1.msra.mxu0 0.0
      %2224 = vmatprep.subr.mxu0 0.0
      %2225 = vmatpush1.msra.mxu0 0.0
      %2226 = vmatprep.subr.mxu0 0.0
      %2227 = vmatpush1.msra.mxu0 0.0
      %2228 = vmatprep.subr.mxu0 0.0
      %2229 = vmatpush1.msra.mxu0 0.0
      %2230 = vmatprep.subr.mxu0 0.0
      %2231 = vmatpush1.msra.mxu0 0.0
      %2232 = vmatprep.subr.mxu0 0.0
      %2233 = vmatpush1.msra.mxu0 0.0
      %2234 = vmatprep.subr.mxu0 0.0
      %2235 = vmatpush1.msra.mxu0 0.0
      %2236 = vmatprep.subr.mxu0 0.0
      %2237 = vmatpush1.msra.mxu0 0.0
      %2238 = vmatprep.subr.mxu0 0.0
      %2239 = vmatpush1.msra.mxu0 0.0
      %2240 = vmatprep.subr.mxu0 0.0
      %2241 = vmatpush1.msra.mxu0 0.0
      %2242 = vmatprep.subr.mxu0 0.0
      %2243 = vmatpush1.msra.mxu0 0.0
      %2244 = vmatprep.subr.mxu0 0.0
      %2245 = vmatpush1.msra.mxu0 0.0
      %2246 = vmatprep.subr.mxu0 0.0
      %2247 = vmatpush1.msra.mxu0 0.0
      %2248 = vmatprep.subr.mxu0 0.0
      %2249 = vmatpush1.msra.mxu0 0.0
      %2250 = vmatprep.subr.mxu0 0.0
      %2251 = vmatpush1.msra.mxu0 0.0
      %2252 = vmatprep.subr.mxu0 0.0
      %2253 = vmatpush1.msra.mxu0 0.0
      %2254 = vmatprep.subr.mxu0 0.0
      %2255 = vmatpush1.msra.mxu0 0.0
      %2256 = vmatprep.subr.mxu0 0.0
      %2257 = vmatpush1.msra.mxu0 0.0
      %2258 = vmatprep.subr.mxu0 0.0
      %2259 = vmatpush1.msra.mxu0 0.0
      %2260 = vmatprep.subr.mxu0 0.0
      %2261 = vmatpush1.msra.mxu0 0.0
      %2262 = vmatprep.subr.mxu0 0.0
      %2263 = vmatpush1.msra.mxu0 0.0
      %2264 = vmatprep.subr.mxu0 0.0
      %2265 = vmatpush1.msra.mxu0 0.0
      %2266 = vmatprep.subr.mxu0 0.0
      %2267 = vmatpush1.msra.mxu0 0.0
      %2268 = vmatprep.subr.mxu0 0.0
      %2269 = vmatpush1.msra.mxu0 0.0
      %2270 = vmatprep.subr.mxu0 0.0
      %2271 = vmatpush1.msra.mxu0 0.0
      %2272 = vmatprep.subr.mxu0 0.0
      %2273 = vmatpush1.msra.mxu0 0.0
      %2274 = vmatprep.subr.mxu0 0.0
      %2275 = vmatpush1.msra.mxu0 0.0
      %2276 = vmatprep.subr.mxu0 0.0
      %2277 = vmatpush1.msra.mxu0 0.0
      %2278 = vmatprep.subr.mxu0 0.0
      %2279 = vmatpush1.msra.mxu0 0.0
      %2280 = vmatprep.mubr.f32.mxu0 0.0
      %2281 = vmatmul.mubr.f32.gmra.mrb[0].mxu0 %v2208
      %v2282 = vpop.f32.mrb[0].mxu0
      %v2283 = vadd.f32 %v2205, %v2282
      %v2284 = vpop.f32.mrb[0].mxu0
      %v2285 = vadd.f32 %v2205, %v2284
      %2286 = vdwg.mxu0
      %v2287 = vsel %vm314, %v2283, 0.0
      %v2288 = vsel %vm314, %v2285, 0.0
      %v2289 = vadd.f32 %v2287, %v2288
      %2290 = vadd.xlane.f32.xlu0 %v2289
      %v2291 = vpop.xlane.xlu0 %2290
      %v2292 = vmul.f32 %v2283, %v2283
      %v2293 = vmul.f32 %v2285, %v2285
      %v2294 = vsel %vm314, %v2292, 0.0
      %v2295 = vsel %vm314, %v2293, 0.0
      %v2296 = vadd.f32 %v2294, %v2295
      %2297 = vadd.xlane.f32.xlu0 %v2296
      %v2298 = vpop.xlane.xlu0 %2297
      %v2299 = vmul.f32 %v2291, 0.00390625
      %v2300 = vmul.f32 %v2298, 0.00390625
      %v2301 = vmul.f32 %v2299, %v2299
      %v2302 = vsub.f32 %v2300, %v2301
      %v2303 = vadd.f32 %v2302, 1e-05
      %v2304 = vrsqrt.pop %v2303
      %v2305 = vsub.f32 %v2283, %v2299
      %v2306 = vsub.f32 %v2285, %v2299
      %v2307 = vmul.f32 %v2305, %v2304
      %v2308 = vmul.f32 %v2306, %v2304
      %v2309 = vmax.f32 %v2307, 0.0
      %v2310 = vmax.f32 %v2308, 0.0
      %v2311 = vadd.f32 %v2309, %v279
      %v2312 = vadd.f32 %v2310, %v284
      %v2315 = vcombine.low %v2311, %v2312
      %2317 = vst [vmem:[%s278] sm:$0xff] %v2315
      %p2318 = scmp.lt.s32.totalorder %s18, 1
      %s2319 = scalar_select %p2318, %s18, 1
      %s2320 = smul.addr %s2319, 2
      %s2321 = smul.addr %s2320, 4
      %s2322 = scalar_lea.vmem %s7, %s2321
      // Predicated region
      $region49: #{gsc2d_forward.1} parent=47 // pred_check
        %p2323 = pneg %p188
      $region50: #{gsc2d_forward.1} parent=47 // pred_check_branch
        %2325 = sbr.rel (%p2323) target = $region52
      $region51: #{gsc2d_forward.1} parent=47 // pred_region
        _
      $region52: #{gsc2d_forward.1} parent=47 // pred_fallthru
        _
    $region48: #{gsc2d_forward.1} parent=5 // pred_fallthru
      _
    %p2326 = scmp.le.s32.totalorder 2, %s13
    // Predicated region
    $region53: #{gsc2d_forward.1} parent=5 // pred_check
      %p2327 = pneg %p2326
    $region54: #{gsc2d_forward.1} parent=5 // pred_check_branch
      %2329 = sbr.rel (%p2327) target = $region56
    $region55: #{gsc2d_forward.1} parent=5 // pred_region
      %s2330 = ssub.s32 %s13, 2
      // Predicated region
      $region57: #{gsc2d_forward.1} parent=55 // pred_check
        %p2331 = pneg %p194
      $region58: #{gsc2d_forward.1} parent=55 // pred_check_branch
        %2333 = sbr.rel (%p2331) target = $region60
      $region59: #{gsc2d_forward.1} parent=55 // pred_region
        %p2334 = scmp.lt.s32.totalorder %s19, 1
        %s2335 = scalar_select %p2334, %s19, 1
        %s2336 = smul.addr %s2335, 2
        %s2337 = smul.addr %s2336, 4
        %s2338 = scalar_lea.vmem %s7, %s2337
      $region60: #{gsc2d_forward.1} parent=55 // pred_fallthru
        _
    $region56: #{gsc2d_forward.1} parent=5 // pred_fallthru
      _
  $region6: #{gsc2d_forward.1} parent=0 // loop_footer
    %s17 = sadd.s32 1, %s13
  $region7: #{gsc2d_forward.1} parent=0 // loop_footer_branch
    %12 = sbr.rel target = $region3
  $region8: #{gsc2d_forward.1} parent=0 // loop_exit
    _

</llo_original>
